<compile_context>
chip_gen: v5e
topology: v5e:2x2
jax: 0.10.0
libtpu: 0.0.40
codegen_flags: <defaults>
</compile_context>

<pallas_src>
import functools

import jax
import jax.numpy as jnp
from jax.experimental import pallas as pl
from jax.experimental.pallas import tpu as pltpu


# Preferred MXU-aligned tiles (v6e/v7x guidance). Small dims fall back to the
# full dimension, which is always a legal block shape.
_TM, _TN, _TK = 256, 256, 512
_VMEM_LIMIT = 48 * 1024 * 1024   # headroom under v7x's 64 MiB physical VMEM


def _pick_tile(dim, preferred, align):
    """Largest power-of-two tile <= preferred that divides dim (>= align)."""
    if dim <= preferred:
        return dim
    t = preferred
    while t >= align:
        if dim % t == 0:
            return t
        t //= 2
    return dim   # full dim fallback (always legal)


# ----------------------------------------------------------------------------
# Tiled linear:  y = x @ W^T + b   (optionally * scale), W kept in (N, K).
# ----------------------------------------------------------------------------
def _linear_kernel(x_ref, w_ref, b_ref, o_ref, acc_ref, *, scale):
    kk = pl.program_id(2)

    @pl.when(kk == 0)
    def _init():
        acc_ref[...] = jnp.zeros_like(acc_ref)

    # x: (tm, tk), w: (tn, tk)  -> contract over K without transposing W.
    acc_ref[...] += jax.lax.dot_general(
        x_ref[...], w_ref[...],
        dimension_numbers=(((1,), (1,)), ((), ())),
        preferred_element_type=jnp.float32)

    @pl.when(kk == pl.num_programs(2) - 1)
    def _finalize():
        out = acc_ref[...] + b_ref[...]
        if scale is not None:
            out = out * scale
        o_ref[...] = out.astype(o_ref.dtype)


def linear_pallas(x2d, weight, bias, *, scale=None):
    """torch.nn.Linear semantics: x2d (M,K), weight (N,K), bias (N,) -> (M,N)."""
    M, K = x2d.shape
    N = weight.shape[0]
    tm = _pick_tile(M, _TM, 8)
    tn = _pick_tile(N, _TN, 128)
    tk = _pick_tile(K, _TK, 128)
    grid = (M // tm, N // tn, K // tk)
    cost = pl.CostEstimate(flops=2 * M * K * N, transcendentals=0,
                           bytes_accessed=4 * (M * K + N * K + M * N + N))
    return pl.pallas_call(
        functools.partial(_linear_kernel, scale=scale),
        out_shape=jax.ShapeDtypeStruct((M, N), x2d.dtype),
        grid=grid,
        in_specs=[
            pl.BlockSpec((tm, tk), lambda i, j, kk: (i, kk)),
            pl.BlockSpec((tn, tk), lambda i, j, kk: (j, kk)),
            pl.BlockSpec((1, tn), lambda i, j, kk: (0, j)),
        ],
        out_specs=pl.BlockSpec((tm, tn), lambda i, j, kk: (i, j)),
        scratch_shapes=[pltpu.VMEM((tm, tn), jnp.float32)],
        compiler_params=pltpu.CompilerParams(
            dimension_semantics=("parallel", "parallel", "arbitrary"),
            vmem_limit_bytes=_VMEM_LIMIT),
        cost_estimate=cost,
    )(x2d, weight, bias.reshape(1, N))


# ----------------------------------------------------------------------------
# Fused key/value projection: one pass over x, two outputs (k and v).
# ----------------------------------------------------------------------------
def _kv_linear_kernel(x_ref, wk_ref, wv_ref, bk_ref, bv_ref,
                      k_ref, v_ref, acck_ref, accv_ref):
    kk = pl.program_id(2)

    @pl.when(kk == 0)
    def _init():
        acck_ref[...] = jnp.zeros_like(acck_ref)
        accv_ref[...] = jnp.zeros_like(accv_ref)

    x = x_ref[...]
    dn = (((1,), (1,)), ((), ()))
    acck_ref[...] += jax.lax.dot_general(x, wk_ref[...], dn,
                                         preferred_element_type=jnp.float32)
    accv_ref[...] += jax.lax.dot_general(x, wv_ref[...], dn,
                                         preferred_element_type=jnp.float32)

    @pl.when(kk == pl.num_programs(2) - 1)
    def _finalize():
        k_ref[...] = (acck_ref[...] + bk_ref[...]).astype(k_ref.dtype)
        v_ref[...] = (accv_ref[...] + bv_ref[...]).astype(v_ref.dtype)


def kv_linear_pallas(x2d, wk, bk, wv, bv):
    """x2d (M,K), wk/wv (N,K), bk/bv (N,) -> (k (M,N), v (M,N))."""
    M, K = x2d.shape
    N = wk.shape[0]
    tm = _pick_tile(M, _TM, 8)
    tn = _pick_tile(N, _TN, 128)
    tk = _pick_tile(K, _TK, 128)
    grid = (M // tm, N // tn, K // tk)
    cost = pl.CostEstimate(
        flops=4 * M * K * N, transcendentals=0,
        bytes_accessed=4 * (M * K + 2 * N * K + 2 * M * N + 2 * N))
    return pl.pallas_call(
        _kv_linear_kernel,
        out_shape=(jax.ShapeDtypeStruct((M, N), x2d.dtype),
                   jax.ShapeDtypeStruct((M, N), x2d.dtype)),
        grid=grid,
        in_specs=[
            pl.BlockSpec((tm, tk), lambda i, j, kk: (i, kk)),
            pl.BlockSpec((tn, tk), lambda i, j, kk: (j, kk)),
            pl.BlockSpec((tn, tk), lambda i, j, kk: (j, kk)),
            pl.BlockSpec((1, tn), lambda i, j, kk: (0, j)),
            pl.BlockSpec((1, tn), lambda i, j, kk: (0, j)),
        ],
        out_specs=(pl.BlockSpec((tm, tn), lambda i, j, kk: (i, j)),
                   pl.BlockSpec((tm, tn), lambda i, j, kk: (i, j))),
        scratch_shapes=[pltpu.VMEM((tm, tn), jnp.float32),
                        pltpu.VMEM((tm, tn), jnp.float32)],
        compiler_params=pltpu.CompilerParams(
            dimension_semantics=("parallel", "parallel", "arbitrary"),
            vmem_limit_bytes=_VMEM_LIMIT),
        cost_estimate=cost,
    )(x2d, wk, wv, bk.reshape(1, N), bv.reshape(1, N))


# ----------------------------------------------------------------------------
# Attention: all heads of one batch element per grid step, lane-dense output.
# ----------------------------------------------------------------------------
def _attn_kernel(q_ref, k_ref, v_ref, o_ref, *, num_heads):
    # q_ref: (H, T, D), k_ref/v_ref: (H, S, D) for one batch element.
    outs = []
    for h in range(num_heads):                       # static unroll over heads
        q = q_ref[h]                                 # (T, D)
        k = k_ref[h]                                 # (S, D)
        v = v_ref[h]                                 # (S, D)
        # scores = q @ k^T (contract head_dim; no explicit transpose of k)
        s = jax.lax.dot_general(q, k, (((1,), (1,)), ((), ())),
                                preferred_element_type=jnp.float32)   # (T, S)
        s = s - jnp.max(s, axis=-1, keepdims=True)
        p = jnp.exp(s)
        p = p * pl.reciprocal(jnp.sum(p, axis=-1, keepdims=True), approx=True)
        # attn dropout: identity (inference semantics)
        outs.append(jnp.dot(p, v, preferred_element_type=jnp.float32))  # (T,D)
    # Lane-dense (T, H*D) slab: out[t, h*D+d] == per-head attn[b*H+h, t, d],
    # exactly the layout the reference feeds to out_proj -> no glue transpose.
    o_ref[0] = jnp.concatenate(outs, axis=-1).astype(o_ref.dtype)


def attention_pallas(q, k, v, *, num_heads):
    """q: (BH, T, D), k/v: (BH, S, D)  ->  (bsz, T, num_heads*D)."""
    BH, T, D = q.shape
    S = k.shape[1]
    bsz = BH // num_heads
    E = num_heads * D
    cost = pl.CostEstimate(
        flops=4 * BH * T * S * D, transcendentals=BH * T * S,
        bytes_accessed=4 * (BH * T * D + 2 * BH * S * D + bsz * T * E))
    return pl.pallas_call(
        functools.partial(_attn_kernel, num_heads=num_heads),
        out_shape=jax.ShapeDtypeStruct((bsz, T, E), q.dtype),
        grid=(bsz,),
        in_specs=[
            pl.BlockSpec((num_heads, T, D), lambda b: (b, 0, 0)),
            pl.BlockSpec((num_heads, S, D), lambda b: (b, 0, 0)),
            pl.BlockSpec((num_heads, S, D), lambda b: (b, 0, 0)),
        ],
        out_specs=pl.BlockSpec((1, T, E), lambda b: (b, 0, 0)),
        compiler_params=pltpu.CompilerParams(
            dimension_semantics=("parallel",),
            vmem_limit_bytes=_VMEM_LIMIT),
        cost_estimate=cost,
    )(q, k, v)


# ----------------------------------------------------------------------------
# Fuser forward (glue in plain JAX, hot paths in Pallas)
# ----------------------------------------------------------------------------
def fuser_forward(params, query, key, *, num_heads):
    bsz, tgt_len, embed_dim = query.shape
    head_dim = embed_dim // num_heads
    scaling = head_dim ** (-0.5)

    # q = self.query(query) * scaling   (scale folded into the kernel epilogue)
    q2d = linear_pallas(query.reshape(-1, embed_dim),
                        params["wq"], params["bq"], scale=scaling)

    # k, v = split(self.key_value(key)) — fused kernel, two outputs, x read once.
    k2d, v2d = kv_linear_pallas(key.reshape(-1, embed_dim),
                                params["wk"], params["bk"],
                                params["wv"], params["bv"])

    # Reproduce the reference module's raw .view() reshapes exactly (no head
    # transpose — identical flat ordering to torch .contiguous().view()).
    q = q2d.reshape(bsz * num_heads, tgt_len, head_dim)
    k = k2d.reshape(bsz * num_heads, -1, head_dim)
    v = v2d.reshape(bsz * num_heads, -1, head_dim)

    # softmax(q k^T) v, all heads of a batch element per grid step; the kernel
    # emits (bsz, tgt_len, embed_dim) already in out_proj's row order.
    attn = attention_pallas(q, k, v, num_heads=num_heads)

    out2d = linear_pallas(attn.reshape(-1, embed_dim),
                          params["wo"], params["bo"])
    return out2d.reshape(bsz, tgt_len, embed_dim)


# Pure-jnp reference (direct translation of the torch module) for sanity check.
def fuser_reference(params, query, key, *, num_heads):
    bsz, tgt_len, embed_dim = query.shape
    head_dim = embed_dim // num_heads
    scaling = head_dim ** (-0.5)

    q = query @ params["wq"].T + params["bq"]
    k = key @ params["wk"].T + params["bk"]
    v = key @ params["wv"].T + params["bv"]

    q = q.reshape(bsz * num_heads, tgt_len, head_dim) * scaling
    k = k.reshape(bsz * num_heads, -1, head_dim)
    v = v.reshape(bsz * num_heads, -1, head_dim)

    s = jnp.einsum("btd,bsd->bts", q, k)
    p = jax.nn.softmax(s, axis=-1)
    attn = jnp.einsum("bts,bsd->btd", p, v)

    if attn.shape[1] == 1:
        attn = attn.reshape(tgt_len, bsz, embed_dim)
    else:
        attn = jnp.transpose(attn, (1, 0, 2)).reshape(tgt_len, bsz, embed_dim)
    out = attn @ params["wo"].T + params["bo"]
    return jnp.transpose(out, (1, 0, 2))


def init_params(key, embed_dim):
    ks = jax.random.split(key, 8)
    s = embed_dim ** (-0.5)
    u = lambda k, shape: jax.random.uniform(k, shape, jnp.float32, -s, s)
    # key_value's (2E, E) weight is stored pre-split into its k and v halves
    # (done once at init — mathematically identical to the single Linear).
    return {
        "wq": u(ks[0], (embed_dim, embed_dim)), "bq": u(ks[1], (embed_dim,)),
        "wk": u(ks[2], (embed_dim, embed_dim)), "bk": u(ks[3], (embed_dim,)),
        "wv": u(ks[4], (embed_dim, embed_dim)), "bv": u(ks[5], (embed_dim,)),
        "wo": u(ks[6], (embed_dim, embed_dim)), "bo": u(ks[7], (embed_dim,)),
    }


if __name__ == "__main__":
    # Small shapes consistent with the module: embed_dim divisible by num_heads.
    embed_dim, num_heads = 32, 8
    bsz, tgt_len = 2, 8
    num_ret, ret_len = 2, 4

    root = jax.random.PRNGKey(0)
    kp, kq, kk = jax.random.split(root, 3)
    params = init_params(kp, embed_dim)
    query = jax.random.normal(kq, (bsz, tgt_len, embed_dim), jnp.float32)
    key = jax.random.normal(kk, (num_ret, bsz, ret_len, embed_dim), jnp.float32)

    fwd = jax.jit(functools.partial(fuser_forward, num_heads=num_heads))
    out = fwd(params, query, key)
    out = jax.block_until_ready(out)

    ref = fuser_reference(params, query, key, num_heads=num_heads)
    assert out.shape == (bsz, tgt_len, embed_dim)
    assert jnp.allclose(out, ref, rtol=1e-2, atol=1e-2)

    print("KERNEL_OK")
</pallas_src>

<mosaic_0001>
module attributes {stable_mosaic.version = 11 : i64} {
  func.func @_linear_kernel(%arg0: i32, %arg1: i32, %arg2: i32, %arg3: memref<16x32xf32, #tpu.memory_space<vmem>>, %arg4: memref<32x32xf32, #tpu.memory_space<vmem>>, %arg5: memref<1x32xf32, #tpu.memory_space<vmem>>, %arg6: memref<16x32xf32, #tpu.memory_space<vmem>>, %arg7: memref<16x32xf32, #tpu.memory_space<vmem>>) attributes {dimension_semantics = [#tpu.dimension_semantics<parallel>, #tpu.dimension_semantics<parallel>, #tpu.dimension_semantics<arbitrary>], iteration_bounds = array<i64: 1, 1, 1>, scalar_prefetch = 0 : i64, scratch_operands = 1 : i64, tpu.core_type = #tpu.core_type<tc>, window_params = [{transform_indices = @transform_0, window_bounds = array<i64: 16, 32>}, {transform_indices = @transform_1, window_bounds = array<i64: 32, 32>}, {transform_indices = @transform_2, window_bounds = array<i64: 1, 32>}, {transform_indices = @transform_3, window_bounds = array<i64: 16, 32>}]} {
    %c0_i32 = arith.constant 0 : i32
    %0 = arith.cmpi eq, %arg2, %c0_i32 : i32
    %1 = arith.extui %0 : i1 to i32
    %c0_i32_0 = arith.constant 0 : i32
    %2 = arith.cmpi ne, %1, %c0_i32_0 : i32
    scf.if %2 {
      %cst_10 = arith.constant 0.000000e+00 : f32
      %12 = vector.broadcast %cst_10 : f32 to vector<16x32xf32>
      %c0_11 = arith.constant 0 : index
      %c0_12 = arith.constant 0 : index
      %13 = vector.load %arg7[%c0_11, %c0_12] : memref<16x32xf32, #tpu.memory_space<vmem>>, vector<16x32xf32>
      tpu.vector_store %arg7[%c0_11, %c0_12], %12 {strides = array<i32>} : memref<16x32xf32, #tpu.memory_space<vmem>>, vector<16x32xf32>,
    } else {
    }
    %c0 = arith.constant 0 : index
    %c0_1 = arith.constant 0 : index
    %3 = vector.load %arg7[%c0, %c0_1] : memref<16x32xf32, #tpu.memory_space<vmem>>, vector<16x32xf32>
    %c0_2 = arith.constant 0 : index
    %c0_3 = arith.constant 0 : index
    %4 = vector.load %arg3[%c0_2, %c0_3] : memref<16x32xf32, #tpu.memory_space<vmem>>, vector<16x32xf32>
    %c0_4 = arith.constant 0 : index
    %c0_5 = arith.constant 0 : index
    %5 = vector.load %arg4[%c0_4, %c0_5] : memref<32x32xf32, #tpu.memory_space<vmem>>, vector<32x32xf32>
    %cst = arith.constant dense<0.000000e+00> : vector<16x32xf32>
    %6 = tpu.matmul %4, %5, %cst {dimension_numbers = #tpu.dot_dimension_numbers<[1], [1], [0], [0], [0, 0, 1, 0], [], []>} : vector<16x32xf32>, vector<32x32xf32>, vector<16x32xf32> -> vector<16x32xf32>
    %7 = arith.addf %3, %6 : vector<16x32xf32>
    %c0_6 = arith.constant 0 : index
    %c0_7 = arith.constant 0 : index
    %8 = vector.load %arg7[%c0_6, %c0_7] : memref<16x32xf32, #tpu.memory_space<vmem>>, vector<16x32xf32>
    tpu.vector_store %arg7[%c0_6, %c0_7], %7 {strides = array<i32>} : memref<16x32xf32, #tpu.memory_space<vmem>>, vector<16x32xf32>,
    %c0_i32_8 = arith.constant 0 : i32
    %9 = arith.cmpi eq, %arg2, %c0_i32_8 : i32
    %10 = arith.extui %9 : i1 to i32
    %c0_i32_9 = arith.constant 0 : i32
    %11 = arith.cmpi ne, %10, %c0_i32_9 : i32
    scf.if %11 {
      %c0_10 = arith.constant 0 : index
      %c0_11 = arith.constant 0 : index
      %12 = vector.load %arg7[%c0_10, %c0_11] : memref<16x32xf32, #tpu.memory_space<vmem>>, vector<16x32xf32>
      %c0_12 = arith.constant 0 : index
      %c0_13 = arith.constant 0 : index
      %13 = vector.load %arg5[%c0_12, %c0_13] : memref<1x32xf32, #tpu.memory_space<vmem>>, vector<1x32xf32>
      %14 = vector.broadcast %13 : vector<1x32xf32> to vector<16x32xf32>
      %15 = arith.addf %12, %14 : vector<16x32xf32>
      %cst_14 = arith.constant 5.000000e-01 : f32
      %16 = vector.broadcast %cst_14 : f32 to vector<16x32xf32>
      %17 = arith.mulf %15, %16 : vector<16x32xf32>
      %c0_15 = arith.constant 0 : index
      %c0_16 = arith.constant 0 : index
      %18 = vector.load %arg6[%c0_15, %c0_16] : memref<16x32xf32, #tpu.memory_space<vmem>>, vector<16x32xf32>
      tpu.vector_store %arg6[%c0_15, %c0_16], %17 {strides = array<i32>} : memref<16x32xf32, #tpu.memory_space<vmem>>, vector<16x32xf32>,
    } else {
    }
    return
  }
  func.func @transform_0(%arg0: i32, %arg1: i32, %arg2: i32) -> (i32, i32) {
    %c0_i32 = arith.constant 0 : i32
    return %arg0, %arg2 : i32, i32
  }
  func.func @transform_1(%arg0: i32, %arg1: i32, %arg2: i32) -> (i32, i32) {
    %c0_i32 = arith.constant 0 : i32
    return %arg1, %arg2 : i32, i32
  }
  func.func @transform_2(%arg0: i32, %arg1: i32, %arg2: i32) -> (i32, i32) {
    %c0_i32 = arith.constant 0 : i32
    %c0_i32_0 = arith.constant 0 : i32
    return %c0_i32, %arg1 : i32, i32
  }
  func.func @transform_3(%arg0: i32, %arg1: i32, %arg2: i32) -> (i32, i32) {
    %c0_i32 = arith.constant 0 : i32
    return %arg0, %arg1 : i32, i32
  }
}

module attributes {stable_mosaic.version = 11 : i64} {
  func.func @_kv_linear_kernel(%arg0: i32, %arg1: i32, %arg2: i32, %arg3: memref<16x32xf32, #tpu.memory_space<vmem>>, %arg4: memref<32x32xf32, #tpu.memory_space<vmem>>, %arg5: memref<32x32xf32, #tpu.memory_space<vmem>>, %arg6: memref<1x32xf32, #tpu.memory_space<vmem>>, %arg7: memref<1x32xf32, #tpu.memory_space<vmem>>, %arg8: memref<16x32xf32, #tpu.memory_space<vmem>>, %arg9: memref<16x32xf32, #tpu.memory_space<vmem>>, %arg10: memref<16x32xf32, #tpu.memory_space<vmem>>, %arg11: memref<16x32xf32, #tpu.memory_space<vmem>>) attributes {dimension_semantics = [#tpu.dimension_semantics<parallel>, #tpu.dimension_semantics<parallel>, #tpu.dimension_semantics<arbitrary>], iteration_bounds = array<i64: 1, 1, 1>, scalar_prefetch = 0 : i64, scratch_operands = 2 : i64, tpu.core_type = #tpu.core_type<tc>, window_params = [{transform_indices = @transform_0, window_bounds = array<i64: 16, 32>}, {transform_indices = @transform_1, window_bounds = array<i64: 32, 32>}, {transform_indices = @transform_2, window_bounds = array<i64: 32, 32>}, {transform_indices = @transform_3, window_bounds = array<i64: 1, 32>}, {transform_indices = @transform_4, window_bounds = array<i64: 1, 32>}, {transform_indices = @transform_5, window_bounds = array<i64: 16, 32>}, {transform_indices = @transform_6, window_bounds = array<i64: 16, 32>}]} {
    %c0_i32 = arith.constant 0 : i32
    %0 = arith.cmpi eq, %arg2, %c0_i32 : i32
    %1 = arith.extui %0 : i1 to i32
    %c0_i32_0 = arith.constant 0 : i32
    %2 = arith.cmpi ne, %1, %c0_i32_0 : i32
    scf.if %2 {
      %cst_17 = arith.constant 0.000000e+00 : f32
      %17 = vector.broadcast %cst_17 : f32 to vector<16x32xf32>
      %c0_18 = arith.constant 0 : index
      %c0_19 = arith.constant 0 : index
      %18 = vector.load %arg10[%c0_18, %c0_19] : memref<16x32xf32, #tpu.memory_space<vmem>>, vector<16x32xf32>
      tpu.vector_store %arg10[%c0_18, %c0_19], %17 {strides = array<i32>} : memref<16x32xf32, #tpu.memory_space<vmem>>, vector<16x32xf32>,
      %cst_20 = arith.constant 0.000000e+00 : f32
      %19 = vector.broadcast %cst_20 : f32 to vector<16x32xf32>
      %c0_21 = arith.constant 0 : index
      %c0_22 = arith.constant 0 : index
      %20 = vector.load %arg11[%c0_21, %c0_22] : memref<16x32xf32, #tpu.memory_space<vmem>>, vector<16x32xf32>
      tpu.vector_store %arg11[%c0_21, %c0_22], %19 {strides = array<i32>} : memref<16x32xf32, #tpu.memory_space<vmem>>, vector<16x32xf32>,
    } else {
    }
    %c0 = arith.constant 0 : index
    %c0_1 = arith.constant 0 : index
    %3 = vector.load %arg3[%c0, %c0_1] : memref<16x32xf32, #tpu.memory_space<vmem>>, vector<16x32xf32>
    %c0_2 = arith.constant 0 : index
    %c0_3 = arith.constant 0 : index
    %4 = vector.load %arg10[%c0_2, %c0_3] : memref<16x32xf32, #tpu.memory_space<vmem>>, vector<16x32xf32>
    %c0_4 = arith.constant 0 : index
    %c0_5 = arith.constant 0 : index
    %5 = vector.load %arg4[%c0_4, %c0_5] : memref<32x32xf32, #tpu.memory_space<vmem>>, vector<32x32xf32>
    %cst = arith.constant dense<0.000000e+00> : vector<16x32xf32>
    %6 = tpu.matmul %3, %5, %cst {dimension_numbers = #tpu.dot_dimension_numbers<[1], [1], [0], [0], [0, 0, 1, 0], [], []>} : vector<16x32xf32>, vector<32x32xf32>, vector<16x32xf32> -> vector<16x32xf32>
    %7 = arith.addf %4, %6 : vector<16x32xf32>
    %c0_6 = arith.constant 0 : index
    %c0_7 = arith.constant 0 : index
    %8 = vector.load %arg10[%c0_6, %c0_7] : memref<16x32xf32, #tpu.memory_space<vmem>>, vector<16x32xf32>
    tpu.vector_store %arg10[%c0_6, %c0_7], %7 {strides = array<i32>} : memref<16x32xf32, #tpu.memory_space<vmem>>, vector<16x32xf32>,
    %c0_8 = arith.constant 0 : index
    %c0_9 = arith.constant 0 : index
    %9 = vector.load %arg11[%c0_8, %c0_9] : memref<16x32xf32, #tpu.memory_space<vmem>>, vector<16x32xf32>
    %c0_10 = arith.constant 0 : index
    %c0_11 = arith.constant 0 : index
    %10 = vector.load %arg5[%c0_10, %c0_11] : memref<32x32xf32, #tpu.memory_space<vmem>>, vector<32x32xf32>
    %cst_12 = arith.constant dense<0.000000e+00> : vector<16x32xf32>
    %11 = tpu.matmul %3, %10, %cst_12 {dimension_numbers = #tpu.dot_dimension_numbers<[1], [1], [0], [0], [0, 0, 1, 0], [], []>} : vector<16x32xf32>, vector<32x32xf32>, vector<16x32xf32> -> vector<16x32xf32>
    %12 = arith.addf %9, %11 : vector<16x32xf32>
    %c0_13 = arith.constant 0 : index
    %c0_14 = arith.constant 0 : index
    %13 = vector.load %arg11[%c0_13, %c0_14] : memref<16x32xf32, #tpu.memory_space<vmem>>, vector<16x32xf32>
    tpu.vector_store %arg11[%c0_13, %c0_14], %12 {strides = array<i32>} : memref<16x32xf32, #tpu.memory_space<vmem>>, vector<16x32xf32>,
    %c0_i32_15 = arith.constant 0 : i32
    %14 = arith.cmpi eq, %arg2, %c0_i32_15 : i32
    %15 = arith.extui %14 : i1 to i32
    %c0_i32_16 = arith.constant 0 : i32
    %16 = arith.cmpi ne, %15, %c0_i32_16 : i32
    scf.if %16 {
      %c0_17 = arith.constant 0 : index
      %c0_18 = arith.constant 0 : index
      %17 = vector.load %arg10[%c0_17, %c0_18] : memref<16x32xf32, #tpu.memory_space<vmem>>, vector<16x32xf32>
      %c0_19 = arith.constant 0 : index
      %c0_20 = arith.constant 0 : index
      %18 = vector.load %arg6[%c0_19, %c0_20] : memref<1x32xf32, #tpu.memory_space<vmem>>, vector<1x32xf32>
      %19 = vector.broadcast %18 : vector<1x32xf32> to vector<16x32xf32>
      %20 = arith.addf %17, %19 : vector<16x32xf32>
      %c0_21 = arith.constant 0 : index
      %c0_22 = arith.constant 0 : index
      %21 = vector.load %arg8[%c0_21, %c0_22] : memref<16x32xf32, #tpu.memory_space<vmem>>, vector<16x32xf32>
      tpu.vector_store %arg8[%c0_21, %c0_22], %20 {strides = array<i32>} : memref<16x32xf32, #tpu.memory_space<vmem>>, vector<16x32xf32>,
      %c0_23 = arith.constant 0 : index
      %c0_24 = arith.constant 0 : index
      %22 = vector.load %arg11[%c0_23, %c0_24] : memref<16x32xf32, #tpu.memory_space<vmem>>, vector<16x32xf32>
      %c0_25 = arith.constant 0 : index
      %c0_26 = arith.constant 0 : index
      %23 = vector.load %arg7[%c0_25, %c0_26] : memref<1x32xf32, #tpu.memory_space<vmem>>, vector<1x32xf32>
      %24 = vector.broadcast %23 : vector<1x32xf32> to vector<16x32xf32>
      %25 = arith.addf %22, %24 : vector<16x32xf32>
      %c0_27 = arith.constant 0 : index
      %c0_28 = arith.constant 0 : index
      %26 = vector.load %arg9[%c0_27, %c0_28] : memref<16x32xf32, #tpu.memory_space<vmem>>, vector<16x32xf32>
      tpu.vector_store %arg9[%c0_27, %c0_28], %25 {strides = array<i32>} : memref<16x32xf32, #tpu.memory_space<vmem>>, vector<16x32xf32>,
    } else {
    }
    return
  }
  func.func @transform_0(%arg0: i32, %arg1: i32, %arg2: i32) -> (i32, i32) {
    %c0_i32 = arith.constant 0 : i32
    return %arg0, %arg2 : i32, i32
  }
  func.func @transform_1(%arg0: i32, %arg1: i32, %arg2: i32) -> (i32, i32) {
    %c0_i32 = arith.constant 0 : i32
    return %arg1, %arg2 : i32, i32
  }
  func.func @transform_2(%arg0: i32, %arg1: i32, %arg2: i32) -> (i32, i32) {
    %c0_i32 = arith.constant 0 : i32
    return %arg1, %arg2 : i32, i32
  }
  func.func @transform_3(%arg0: i32, %arg1: i32, %arg2: i32) -> (i32, i32) {
    %c0_i32 = arith.constant 0 : i32
    %c0_i32_0 = arith.constant 0 : i32
    return %c0_i32, %arg1 : i32, i32
  }
  func.func @transform_4(%arg0: i32, %arg1: i32, %arg2: i32) -> (i32, i32) {
    %c0_i32 = arith.constant 0 : i32
    %c0_i32_0 = arith.constant 0 : i32
    return %c0_i32, %arg1 : i32, i32
  }
  func.func @transform_5(%arg0: i32, %arg1: i32, %arg2: i32) -> (i32, i32) {
    %c0_i32 = arith.constant 0 : i32
    return %arg0, %arg1 : i32, i32
  }
  func.func @transform_6(%arg0: i32, %arg1: i32, %arg2: i32) -> (i32, i32) {
    %c0_i32 = arith.constant 0 : i32
    return %arg0, %arg1 : i32, i32
  }
}

module attributes {stable_mosaic.version = 11 : i64} {
  func.func @_attn_kernel(%arg0: i32, %arg1: memref<8x8x4xf32, #tpu.memory_space<vmem>>, %arg2: memref<8x8x4xf32, #tpu.memory_space<vmem>>, %arg3: memref<8x8x4xf32, #tpu.memory_space<vmem>>, %arg4: memref<1x8x32xf32, #tpu.memory_space<vmem>>) attributes {dimension_semantics = [#tpu.dimension_semantics<parallel>], iteration_bounds = array<i64: 2>, scalar_prefetch = 0 : i64, scratch_operands = 0 : i64, tpu.core_type = #tpu.core_type<tc>, window_params = [{transform_indices = @transform_0, window_bounds = array<i64: 8, 8, 4>}, {transform_indices = @transform_1, window_bounds = array<i64: 8, 8, 4>}, {transform_indices = @transform_2, window_bounds = array<i64: 8, 8, 4>}, {transform_indices = @transform_3, window_bounds = array<i64: 1, 8, 32>}]} {
    %c0 = arith.constant 0 : index
    %c0_0 = arith.constant 0 : index
    %c0_1 = arith.constant 0 : index
    %0 = vector.load %arg1[%c0, %c0_0, %c0_1] : memref<8x8x4xf32, #tpu.memory_space<vmem>>, vector<1x8x4xf32>
    %1 = vector.shape_cast %0 : vector<1x8x4xf32> to vector<8x4xf32>
    %c0_2 = arith.constant 0 : index
    %c0_3 = arith.constant 0 : index
    %c0_4 = arith.constant 0 : index
    %2 = vector.load %arg2[%c0_2, %c0_3, %c0_4] : memref<8x8x4xf32, #tpu.memory_space<vmem>>, vector<1x8x4xf32>
    %3 = vector.shape_cast %2 : vector<1x8x4xf32> to vector<8x4xf32>
    %c0_5 = arith.constant 0 : index
    %c0_6 = arith.constant 0 : index
    %c0_7 = arith.constant 0 : index
    %4 = vector.load %arg3[%c0_5, %c0_6, %c0_7] : memref<8x8x4xf32, #tpu.memory_space<vmem>>, vector<1x8x4xf32>
    %5 = vector.shape_cast %4 : vector<1x8x4xf32> to vector<8x4xf32>
    %cst = arith.constant dense<0.000000e+00> : vector<8x8xf32>
    %6 = tpu.matmul %1, %3, %cst {dimension_numbers = #tpu.dot_dimension_numbers<[1], [1], [0], [0], [0, 0, 1, 0], [], []>} : vector<8x4xf32>, vector<8x4xf32>, vector<8x8xf32> -> vector<8x8xf32>
    %cst_8 = arith.constant dense<0xFF800000> : vector<8xf32>
    %7 = vector.multi_reduction <maximumf>, %6, %cst_8 [1] : vector<8x8xf32> to vector<8xf32>
    %8 = vector.shape_cast %7 : vector<8xf32> to vector<8x1xf32>
    %9 = vector.broadcast %8 : vector<8x1xf32> to vector<8x8xf32>
    %10 = arith.subf %6, %9 : vector<8x8xf32>
    %11 = math.exp %10 : vector<8x8xf32>
    %cst_9 = arith.constant dense<0.000000e+00> : vector<8xf32>
    %12 = vector.multi_reduction <add>, %11, %cst_9 [1] : vector<8x8xf32> to vector<8xf32>
    %13 = vector.shape_cast %12 : vector<8xf32> to vector<8x1xf32>
    %14 = tpu.reciprocal %13 {approx = true} : vector<8x1xf32> -> vector<8x1xf32>
    %15 = vector.broadcast %14 : vector<8x1xf32> to vector<8x8xf32>
    %16 = arith.mulf %11, %15 : vector<8x8xf32>
    %cst_10 = arith.constant dense<0.000000e+00> : vector<8x4xf32>
    %17 = tpu.matmul %16, %5, %cst_10 {dimension_numbers = #tpu.dot_dimension_numbers<[1], [0], [0], [1], [0, 0, 1, 1], [], []>} : vector<8x8xf32>, vector<8x4xf32>, vector<8x4xf32> -> vector<8x4xf32>
    %c1 = arith.constant 1 : index
    %c0_11 = arith.constant 0 : index
    %c0_12 = arith.constant 0 : index
    %18 = vector.load %arg1[%c1, %c0_11, %c0_12] : memref<8x8x4xf32, #tpu.memory_space<vmem>>, vector<1x8x4xf32>
    %19 = vector.shape_cast %18 : vector<1x8x4xf32> to vector<8x4xf32>
    %c1_13 = arith.constant 1 : index
    %c0_14 = arith.constant 0 : index
    %c0_15 = arith.constant 0 : index
    %20 = vector.load %arg2[%c1_13, %c0_14, %c0_15] : memref<8x8x4xf32, #tpu.memory_space<vmem>>, vector<1x8x4xf32>
    %21 = vector.shape_cast %20 : vector<1x8x4xf32> to vector<8x4xf32>
    %c1_16 = arith.constant 1 : index
    %c0_17 = arith.constant 0 : index
    %c0_18 = arith.constant 0 : index
    %22 = vector.load %arg3[%c1_16, %c0_17, %c0_18] : memref<8x8x4xf32, #tpu.memory_space<vmem>>, vector<1x8x4xf32>
    %23 = vector.shape_cast %22 : vector<1x8x4xf32> to vector<8x4xf32>
    %cst_19 = arith.constant dense<0.000000e+00> : vector<8x8xf32>
    %24 = tpu.matmul %19, %21, %cst_19 {dimension_numbers = #tpu.dot_dimension_numbers<[1], [1], [0], [0], [0, 0, 1, 0], [], []>} : vector<8x4xf32>, vector<8x4xf32>, vector<8x8xf32> -> vector<8x8xf32>
    %cst_20 = arith.constant dense<0xFF800000> : vector<8xf32>
    %25 = vector.multi_reduction <maximumf>, %24, %cst_20 [1] : vector<8x8xf32> to vector<8xf32>
    %26 = vector.shape_cast %25 : vector<8xf32> to vector<8x1xf32>
    %27 = vector.broadcast %26 : vector<8x1xf32> to vector<8x8xf32>
    %28 = arith.subf %24, %27 : vector<8x8xf32>
    %29 = math.exp %28 : vector<8x8xf32>
    %cst_21 = arith.constant dense<0.000000e+00> : vector<8xf32>
    %30 = vector.multi_reduction <add>, %29, %cst_21 [1] : vector<8x8xf32> to vector<8xf32>
    %31 = vector.shape_cast %30 : vector<8xf32> to vector<8x1xf32>
    %32 = tpu.reciprocal %31 {approx = true} : vector<8x1xf32> -> vector<8x1xf32>
    %33 = vector.broadcast %32 : vector<8x1xf32> to vector<8x8xf32>
    %34 = arith.mulf %29, %33 : vector<8x8xf32>
    %cst_22 = arith.constant dense<0.000000e+00> : vector<8x4xf32>
    %35 = tpu.matmul %34, %23, %cst_22 {dimension_numbers = #tpu.dot_dimension_numbers<[1], [0], [0], [1], [0, 0, 1, 1], [], []>} : vector<8x8xf32>, vector<8x4xf32>, vector<8x4xf32> -> vector<8x4xf32>
    %c2 = arith.constant 2 : index
    %c0_23 = arith.constant 0 : index
    %c0_24 = arith.constant 0 : index
    %36 = vector.load %arg1[%c2, %c0_23, %c0_24] : memref<8x8x4xf32, #tpu.memory_space<vmem>>, vector<1x8x4xf32>
    %37 = vector.shape_cast %36 : vector<1x8x4xf32> to vector<8x4xf32>
    %c2_25 = arith.constant 2 : index
    %c0_26 = arith.constant 0 : index
    %c0_27 = arith.constant 0 : index
    %38 = vector.load %arg2[%c2_25, %c0_26, %c0_27] : memref<8x8x4xf32, #tpu.memory_space<vmem>>, vector<1x8x4xf32>
    %39 = vector.shape_cast %38 : vector<1x8x4xf32> to vector<8x4xf32>
    %c2_28 = arith.constant 2 : index
    %c0_29 = arith.constant 0 : index
    %c0_30 = arith.constant 0 : index
    %40 = vector.load %arg3[%c2_28, %c0_29, %c0_30] : memref<8x8x4xf32, #tpu.memory_space<vmem>>, vector<1x8x4xf32>
    %41 = vector.shape_cast %40 : vector<1x8x4xf32> to vector<8x4xf32>
    %cst_31 = arith.constant dense<0.000000e+00> : vector<8x8xf32>
    %42 = tpu.matmul %37, %39, %cst_31 {dimension_numbers = #tpu.dot_dimension_numbers<[1], [1], [0], [0], [0, 0, 1, 0], [], []>} : vector<8x4xf32>, vector<8x4xf32>, vector<8x8xf32> -> vector<8x8xf32>
    %cst_32 = arith.constant dense<0xFF800000> : vector<8xf32>
    %43 = vector.multi_reduction <maximumf>, %42, %cst_32 [1] : vector<8x8xf32> to vector<8xf32>
    %44 = vector.shape_cast %43 : vector<8xf32> to vector<8x1xf32>
    %45 = vector.broadcast %44 : vector<8x1xf32> to vector<8x8xf32>
    %46 = arith.subf %42, %45 : vector<8x8xf32>
    %47 = math.exp %46 : vector<8x8xf32>
    %cst_33 = arith.constant dense<0.000000e+00> : vector<8xf32>
    %48 = vector.multi_reduction <add>, %47, %cst_33 [1] : vector<8x8xf32> to vector<8xf32>
    %49 = vector.shape_cast %48 : vector<8xf32> to vector<8x1xf32>
    %50 = tpu.reciprocal %49 {approx = true} : vector<8x1xf32> -> vector<8x1xf32>
    %51 = vector.broadcast %50 : vector<8x1xf32> to vector<8x8xf32>
    %52 = arith.mulf %47, %51 : vector<8x8xf32>
    %cst_34 = arith.constant dense<0.000000e+00> : vector<8x4xf32>
    %53 = tpu.matmul %52, %41, %cst_34 {dimension_numbers = #tpu.dot_dimension_numbers<[1], [0], [0], [1], [0, 0, 1, 1], [], []>} : vector<8x8xf32>, vector<8x4xf32>, vector<8x4xf32> -> vector<8x4xf32>
    %c3 = arith.constant 3 : index
    %c0_35 = arith.constant 0 : index
    %c0_36 = arith.constant 0 : index
    %54 = vector.load %arg1[%c3, %c0_35, %c0_36] : memref<8x8x4xf32, #tpu.memory_space<vmem>>, vector<1x8x4xf32>
    %55 = vector.shape_cast %54 : vector<1x8x4xf32> to vector<8x4xf32>
    %c3_37 = arith.constant 3 : index
    %c0_38 = arith.constant 0 : index
    %c0_39 = arith.constant 0 : index
    %56 = vector.load %arg2[%c3_37, %c0_38, %c0_39] : memref<8x8x4xf32, #tpu.memory_space<vmem>>, vector<1x8x4xf32>
    %57 = vector.shape_cast %56 : vector<1x8x4xf32> to vector<8x4xf32>
    %c3_40 = arith.constant 3 : index
    %c0_41 = arith.constant 0 : index
    %c0_42 = arith.constant 0 : index
    %58 = vector.load %arg3[%c3_40, %c0_41, %c0_42] : memref<8x8x4xf32, #tpu.memory_space<vmem>>, vector<1x8x4xf32>
    %59 = vector.shape_cast %58 : vector<1x8x4xf32> to vector<8x4xf32>
    %cst_43 = arith.constant dense<0.000000e+00> : vector<8x8xf32>
    %60 = tpu.matmul %55, %57, %cst_43 {dimension_numbers = #tpu.dot_dimension_numbers<[1], [1], [0], [0], [0, 0, 1, 0], [], []>} : vector<8x4xf32>, vector<8x4xf32>, vector<8x8xf32> -> vector<8x8xf32>
    %cst_44 = arith.constant dense<0xFF800000> : vector<8xf32>
    %61 = vector.multi_reduction <maximumf>, %60, %cst_44 [1] : vector<8x8xf32> to vector<8xf32>
    %62 = vector.shape_cast %61 : vector<8xf32> to vector<8x1xf32>
    %63 = vector.broadcast %62 : vector<8x1xf32> to vector<8x8xf32>
    %64 = arith.subf %60, %63 : vector<8x8xf32>
    %65 = math.exp %64 : vector<8x8xf32>
    %cst_45 = arith.constant dense<0.000000e+00> : vector<8xf32>
    %66 = vector.multi_reduction <add>, %65, %cst_45 [1] : vector<8x8xf32> to vector<8xf32>
    %67 = vector.shape_cast %66 : vector<8xf32> to vector<8x1xf32>
    %68 = tpu.reciprocal %67 {approx = true} : vector<8x1xf32> -> vector<8x1xf32>
    %69 = vector.broadcast %68 : vector<8x1xf32> to vector<8x8xf32>
    %70 = arith.mulf %65, %69 : vector<8x8xf32>
    %cst_46 = arith.constant dense<0.000000e+00> : vector<8x4xf32>
    %71 = tpu.matmul %70, %59, %cst_46 {dimension_numbers = #tpu.dot_dimension_numbers<[1], [0], [0], [1], [0, 0, 1, 1], [], []>} : vector<8x8xf32>, vector<8x4xf32>, vector<8x4xf32> -> vector<8x4xf32>
    %c4 = arith.constant 4 : index
    %c0_47 = arith.constant 0 : index
    %c0_48 = arith.constant 0 : index
    %72 = vector.load %arg1[%c4, %c0_47, %c0_48] : memref<8x8x4xf32, #tpu.memory_space<vmem>>, vector<1x8x4xf32>
    %73 = vector.shape_cast %72 : vector<1x8x4xf32> to vector<8x4xf32>
    %c4_49 = arith.constant 4 : index
    %c0_50 = arith.constant 0 : index
    %c0_51 = arith.constant 0 : index
    %74 = vector.load %arg2[%c4_49, %c0_50, %c0_51] : memref<8x8x4xf32, #tpu.memory_space<vmem>>, vector<1x8x4xf32>
    %75 = vector.shape_cast %74 : vector<1x8x4xf32> to vector<8x4xf32>
    %c4_52 = arith.constant 4 : index
    %c0_53 = arith.constant 0 : index
    %c0_54 = arith.constant 0 : index
    %76 = vector.load %arg3[%c4_52, %c0_53, %c0_54] : memref<8x8x4xf32, #tpu.memory_space<vmem>>, vector<1x8x4xf32>
    %77 = vector.shape_cast %76 : vector<1x8x4xf32> to vector<8x4xf32>
    %cst_55 = arith.constant dense<0.000000e+00> : vector<8x8xf32>
    %78 = tpu.matmul %73, %75, %cst_55 {dimension_numbers = #tpu.dot_dimension_numbers<[1], [1], [0], [0], [0, 0, 1, 0], [], []>} : vector<8x4xf32>, vector<8x4xf32>, vector<8x8xf32> -> vector<8x8xf32>
    %cst_56 = arith.constant dense<0xFF800000> : vector<8xf32>
    %79 = vector.multi_reduction <maximumf>, %78, %cst_56 [1] : vector<8x8xf32> to vector<8xf32>
    %80 = vector.shape_cast %79 : vector<8xf32> to vector<8x1xf32>
    %81 = vector.broadcast %80 : vector<8x1xf32> to vector<8x8xf32>
    %82 = arith.subf %78, %81 : vector<8x8xf32>
    %83 = math.exp %82 : vector<8x8xf32>
    %cst_57 = arith.constant dense<0.000000e+00> : vector<8xf32>
    %84 = vector.multi_reduction <add>, %83, %cst_57 [1] : vector<8x8xf32> to vector<8xf32>
    %85 = vector.shape_cast %84 : vector<8xf32> to vector<8x1xf32>
    %86 = tpu.reciprocal %85 {approx = true} : vector<8x1xf32> -> vector<8x1xf32>
    %87 = vector.broadcast %86 : vector<8x1xf32> to vector<8x8xf32>
    %88 = arith.mulf %83, %87 : vector<8x8xf32>
    %cst_58 = arith.constant dense<0.000000e+00> : vector<8x4xf32>
    %89 = tpu.matmul %88, %77, %cst_58 {dimension_numbers = #tpu.dot_dimension_numbers<[1], [0], [0], [1], [0, 0, 1, 1], [], []>} : vector<8x8xf32>, vector<8x4xf32>, vector<8x4xf32> -> vector<8x4xf32>
    %c5 = arith.constant 5 : index
    %c0_59 = arith.constant 0 : index
    %c0_60 = arith.constant 0 : index
    %90 = vector.load %arg1[%c5, %c0_59, %c0_60] : memref<8x8x4xf32, #tpu.memory_space<vmem>>, vector<1x8x4xf32>
    %91 = vector.shape_cast %90 : vector<1x8x4xf32> to vector<8x4xf32>
    %c5_61 = arith.constant 5 : index
    %c0_62 = arith.constant 0 : index
    %c0_63 = arith.constant 0 : index
    %92 = vector.load %arg2[%c5_61, %c0_62, %c0_63] : memref<8x8x4xf32, #tpu.memory_space<vmem>>, vector<1x8x4xf32>
    %93 = vector.shape_cast %92 : vector<1x8x4xf32> to vector<8x4xf32>
    %c5_64 = arith.constant 5 : index
    %c0_65 = arith.constant 0 : index
    %c0_66 = arith.constant 0 : index
    %94 = vector.load %arg3[%c5_64, %c0_65, %c0_66] : memref<8x8x4xf32, #tpu.memory_space<vmem>>, vector<1x8x4xf32>
    %95 = vector.shape_cast %94 : vector<1x8x4xf32> to vector<8x4xf32>
    %cst_67 = arith.constant dense<0.000000e+00> : vector<8x8xf32>
    %96 = tpu.matmul %91, %93, %cst_67 {dimension_numbers = #tpu.dot_dimension_numbers<[1], [1], [0], [0], [0, 0, 1, 0], [], []>} : vector<8x4xf32>, vector<8x4xf32>, vector<8x8xf32> -> vector<8x8xf32>
    %cst_68 = arith.constant dense<0xFF800000> : vector<8xf32>
    %97 = vector.multi_reduction <maximumf>, %96, %cst_68 [1] : vector<8x8xf32> to vector<8xf32>
    %98 = vector.shape_cast %97 : vector<8xf32> to vector<8x1xf32>
    %99 = vector.broadcast %98 : vector<8x1xf32> to vector<8x8xf32>
    %100 = arith.subf %96, %99 : vector<8x8xf32>
    %101 = math.exp %100 : vector<8x8xf32>
    %cst_69 = arith.constant dense<0.000000e+00> : vector<8xf32>
    %102 = vector.multi_reduction <add>, %101, %cst_69 [1] : vector<8x8xf32> to vector<8xf32>
    %103 = vector.shape_cast %102 : vector<8xf32> to vector<8x1xf32>
    %104 = tpu.reciprocal %103 {approx = true} : vector<8x1xf32> -> vector<8x1xf32>
    %105 = vector.broadcast %104 : vector<8x1xf32> to vector<8x8xf32>
    %106 = arith.mulf %101, %105 : vector<8x8xf32>
    %cst_70 = arith.constant dense<0.000000e+00> : vector<8x4xf32>
    %107 = tpu.matmul %106, %95, %cst_70 {dimension_numbers = #tpu.dot_dimension_numbers<[1], [0], [0], [1], [0, 0, 1, 1], [], []>} : vector<8x8xf32>, vector<8x4xf32>, vector<8x4xf32> -> vector<8x4xf32>
    %c6 = arith.constant 6 : index
    %c0_71 = arith.constant 0 : index
    %c0_72 = arith.constant 0 : index
    %108 = vector.load %arg1[%c6, %c0_71, %c0_72] : memref<8x8x4xf32, #tpu.memory_space<vmem>>, vector<1x8x4xf32>
    %109 = vector.shape_cast %108 : vector<1x8x4xf32> to vector<8x4xf32>
    %c6_73 = arith.constant 6 : index
    %c0_74 = arith.constant 0 : index
    %c0_75 = arith.constant 0 : index
    %110 = vector.load %arg2[%c6_73, %c0_74, %c0_75] : memref<8x8x4xf32, #tpu.memory_space<vmem>>, vector<1x8x4xf32>
    %111 = vector.shape_cast %110 : vector<1x8x4xf32> to vector<8x4xf32>
    %c6_76 = arith.constant 6 : index
    %c0_77 = arith.constant 0 : index
    %c0_78 = arith.constant 0 : index
    %112 = vector.load %arg3[%c6_76, %c0_77, %c0_78] : memref<8x8x4xf32, #tpu.memory_space<vmem>>, vector<1x8x4xf32>
    %113 = vector.shape_cast %112 : vector<1x8x4xf32> to vector<8x4xf32>
    %cst_79 = arith.constant dense<0.000000e+00> : vector<8x8xf32>
    %114 = tpu.matmul %109, %111, %cst_79 {dimension_numbers = #tpu.dot_dimension_numbers<[1], [1], [0], [0], [0, 0, 1, 0], [], []>} : vector<8x4xf32>, vector<8x4xf32>, vector<8x8xf32> -> vector<8x8xf32>
    %cst_80 = arith.constant dense<0xFF800000> : vector<8xf32>
    %115 = vector.multi_reduction <maximumf>, %114, %cst_80 [1] : vector<8x8xf32> to vector<8xf32>
    %116 = vector.shape_cast %115 : vector<8xf32> to vector<8x1xf32>
    %117 = vector.broadcast %116 : vector<8x1xf32> to vector<8x8xf32>
    %118 = arith.subf %114, %117 : vector<8x8xf32>
    %119 = math.exp %118 : vector<8x8xf32>
    %cst_81 = arith.constant dense<0.000000e+00> : vector<8xf32>
    %120 = vector.multi_reduction <add>, %119, %cst_81 [1] : vector<8x8xf32> to vector<8xf32>
    %121 = vector.shape_cast %120 : vector<8xf32> to vector<8x1xf32>
    %122 = tpu.reciprocal %121 {approx = true} : vector<8x1xf32> -> vector<8x1xf32>
    %123 = vector.broadcast %122 : vector<8x1xf32> to vector<8x8xf32>
    %124 = arith.mulf %119, %123 : vector<8x8xf32>
    %cst_82 = arith.constant dense<0.000000e+00> : vector<8x4xf32>
    %125 = tpu.matmul %124, %113, %cst_82 {dimension_numbers = #tpu.dot_dimension_numbers<[1], [0], [0], [1], [0, 0, 1, 1], [], []>} : vector<8x8xf32>, vector<8x4xf32>, vector<8x4xf32> -> vector<8x4xf32>
    %c7 = arith.constant 7 : index
    %c0_83 = arith.constant 0 : index
    %c0_84 = arith.constant 0 : index
    %126 = vector.load %arg1[%c7, %c0_83, %c0_84] : memref<8x8x4xf32, #tpu.memory_space<vmem>>, vector<1x8x4xf32>
    %127 = vector.shape_cast %126 : vector<1x8x4xf32> to vector<8x4xf32>
    %c7_85 = arith.constant 7 : index
    %c0_86 = arith.constant 0 : index
    %c0_87 = arith.constant 0 : index
    %128 = vector.load %arg2[%c7_85, %c0_86, %c0_87] : memref<8x8x4xf32, #tpu.memory_space<vmem>>, vector<1x8x4xf32>
    %129 = vector.shape_cast %128 : vector<1x8x4xf32> to vector<8x4xf32>
    %c7_88 = arith.constant 7 : index
    %c0_89 = arith.constant 0 : index
    %c0_90 = arith.constant 0 : index
    %130 = vector.load %arg3[%c7_88, %c0_89, %c0_90] : memref<8x8x4xf32, #tpu.memory_space<vmem>>, vector<1x8x4xf32>
    %131 = vector.shape_cast %130 : vector<1x8x4xf32> to vector<8x4xf32>
    %cst_91 = arith.constant dense<0.000000e+00> : vector<8x8xf32>
    %132 = tpu.matmul %127, %129, %cst_91 {dimension_numbers = #tpu.dot_dimension_numbers<[1], [1], [0], [0], [0, 0, 1, 0], [], []>} : vector<8x4xf32>, vector<8x4xf32>, vector<8x8xf32> -> vector<8x8xf32>
    %cst_92 = arith.constant dense<0xFF800000> : vector<8xf32>
    %133 = vector.multi_reduction <maximumf>, %132, %cst_92 [1] : vector<8x8xf32> to vector<8xf32>
    %134 = vector.shape_cast %133 : vector<8xf32> to vector<8x1xf32>
    %135 = vector.broadcast %134 : vector<8x1xf32> to vector<8x8xf32>
    %136 = arith.subf %132, %135 : vector<8x8xf32>
    %137 = math.exp %136 : vector<8x8xf32>
    %cst_93 = arith.constant dense<0.000000e+00> : vector<8xf32>
    %138 = vector.multi_reduction <add>, %137, %cst_93 [1] : vector<8x8xf32> to vector<8xf32>
    %139 = vector.shape_cast %138 : vector<8xf32> to vector<8x1xf32>
    %140 = tpu.reciprocal %139 {approx = true} : vector<8x1xf32> -> vector<8x1xf32>
    %141 = vector.broadcast %140 : vector<8x1xf32> to vector<8x8xf32>
    %142 = arith.mulf %137, %141 : vector<8x8xf32>
    %cst_94 = arith.constant dense<0.000000e+00> : vector<8x4xf32>
    %143 = tpu.matmul %142, %131, %cst_94 {dimension_numbers = #tpu.dot_dimension_numbers<[1], [0], [0], [1], [0, 0, 1, 1], [], []>} : vector<8x8xf32>, vector<8x4xf32>, vector<8x4xf32> -> vector<8x4xf32>
    %144 = tpu.concatenate %17, %35, %53, %71, %89, %107, %125, %143 in 1 : vector<8x4xf32>, vector<8x4xf32>, vector<8x4xf32>, vector<8x4xf32>, vector<8x4xf32>, vector<8x4xf32>, vector<8x4xf32>, vector<8x4xf32> -> vector<8x32xf32>
    %c0_95 = arith.constant 0 : index
    %c0_96 = arith.constant 0 : index
    %c0_97 = arith.constant 0 : index
    %145 = vector.load %arg4[%c0_95, %c0_96, %c0_97] : memref<1x8x32xf32, #tpu.memory_space<vmem>>, vector<1x8x32xf32>
    %146 = vector.shape_cast %145 : vector<1x8x32xf32> to vector<8x32xf32>
    %147 = vector.shape_cast %144 : vector<8x32xf32> to vector<1x8x32xf32>
    tpu.vector_store %arg4[%c0_95, %c0_96, %c0_97], %147 {strides = array<i32>} : memref<1x8x32xf32, #tpu.memory_space<vmem>>, vector<1x8x32xf32>,
    return
  }
  func.func @transform_0(%arg0: i32) -> (i32, i32, i32) {
    %c0_i32 = arith.constant 0 : i32
    %c0_i32_0 = arith.constant 0 : i32
    %c0_i32_1 = arith.constant 0 : i32
    return %arg0, %c0_i32, %c0_i32_0 : i32, i32, i32
  }
  func.func @transform_1(%arg0: i32) -> (i32, i32, i32) {
    %c0_i32 = arith.constant 0 : i32
    %c0_i32_0 = arith.constant 0 : i32
    %c0_i32_1 = arith.constant 0 : i32
    return %arg0, %c0_i32, %c0_i32_0 : i32, i32, i32
  }
  func.func @transform_2(%arg0: i32) -> (i32, i32, i32) {
    %c0_i32 = arith.constant 0 : i32
    %c0_i32_0 = arith.constant 0 : i32
    %c0_i32_1 = arith.constant 0 : i32
    return %arg0, %c0_i32, %c0_i32_0 : i32, i32, i32
  }
  func.func @transform_3(%arg0: i32) -> (i32, i32, i32) {
    %c0_i32 = arith.constant 0 : i32
    %c0_i32_0 = arith.constant 0 : i32
    %c0_i32_1 = arith.constant 0 : i32
    return %arg0, %c0_i32, %c0_i32_0 : i32, i32, i32
  }
}

module attributes {stable_mosaic.version = 11 : i64} {
  func.func @_linear_kernel(%arg0: i32, %arg1: i32, %arg2: i32, %arg3: memref<16x32xf32, #tpu.memory_space<vmem>>, %arg4: memref<32x32xf32, #tpu.memory_space<vmem>>, %arg5: memref<1x32xf32, #tpu.memory_space<vmem>>, %arg6: memref<16x32xf32, #tpu.memory_space<vmem>>, %arg7: memref<16x32xf32, #tpu.memory_space<vmem>>) attributes {dimension_semantics = [#tpu.dimension_semantics<parallel>, #tpu.dimension_semantics<parallel>, #tpu.dimension_semantics<arbitrary>], iteration_bounds = array<i64: 1, 1, 1>, scalar_prefetch = 0 : i64, scratch_operands = 1 : i64, tpu.core_type = #tpu.core_type<tc>, window_params = [{transform_indices = @transform_0, window_bounds = array<i64: 16, 32>}, {transform_indices = @transform_1, window_bounds = array<i64: 32, 32>}, {transform_indices = @transform_2, window_bounds = array<i64: 1, 32>}, {transform_indices = @transform_3, window_bounds = array<i64: 16, 32>}]} {
    %c0_i32 = arith.constant 0 : i32
    %0 = arith.cmpi eq, %arg2, %c0_i32 : i32
    %1 = arith.extui %0 : i1 to i32
    %c0_i32_0 = arith.constant 0 : i32
    %2 = arith.cmpi ne, %1, %c0_i32_0 : i32
    scf.if %2 {
      %cst_10 = arith.constant 0.000000e+00 : f32
      %12 = vector.broadcast %cst_10 : f32 to vector<16x32xf32>
      %c0_11 = arith.constant 0 : index
      %c0_12 = arith.constant 0 : index
      %13 = vector.load %arg7[%c0_11, %c0_12] : memref<16x32xf32, #tpu.memory_space<vmem>>, vector<16x32xf32>
      tpu.vector_store %arg7[%c0_11, %c0_12], %12 {strides = array<i32>} : memref<16x32xf32, #tpu.memory_space<vmem>>, vector<16x32xf32>,
    } else {
    }
    %c0 = arith.constant 0 : index
    %c0_1 = arith.constant 0 : index
    %3 = vector.load %arg7[%c0, %c0_1] : memref<16x32xf32, #tpu.memory_space<vmem>>, vector<16x32xf32>
    %c0_2 = arith.constant 0 : index
    %c0_3 = arith.constant 0 : index
    %4 = vector.load %arg3[%c0_2, %c0_3] : memref<16x32xf32, #tpu.memory_space<vmem>>, vector<16x32xf32>
    %c0_4 = arith.constant 0 : index
    %c0_5 = arith.constant 0 : index
    %5 = vector.load %arg4[%c0_4, %c0_5] : memref<32x32xf32, #tpu.memory_space<vmem>>, vector<32x32xf32>
    %cst = arith.constant dense<0.000000e+00> : vector<16x32xf32>
    %6 = tpu.matmul %4, %5, %cst {dimension_numbers = #tpu.dot_dimension_numbers<[1], [1], [0], [0], [0, 0, 1, 0], [], []>} : vector<16x32xf32>, vector<32x32xf32>, vector<16x32xf32> -> vector<16x32xf32>
    %7 = arith.addf %3, %6 : vector<16x32xf32>
    %c0_6 = arith.constant 0 : index
    %c0_7 = arith.constant 0 : index
    %8 = vector.load %arg7[%c0_6, %c0_7] : memref<16x32xf32, #tpu.memory_space<vmem>>, vector<16x32xf32>
    tpu.vector_store %arg7[%c0_6, %c0_7], %7 {strides = array<i32>} : memref<16x32xf32, #tpu.memory_space<vmem>>, vector<16x32xf32>,
    %c0_i32_8 = arith.constant 0 : i32
    %9 = arith.cmpi eq, %arg2, %c0_i32_8 : i32
    %10 = arith.extui %9 : i1 to i32
    %c0_i32_9 = arith.constant 0 : i32
    %11 = arith.cmpi ne, %10, %c0_i32_9 : i32
    scf.if %11 {
      %c0_10 = arith.constant 0 : index
      %c0_11 = arith.constant 0 : index
      %12 = vector.load %arg7[%c0_10, %c0_11] : memref<16x32xf32, #tpu.memory_space<vmem>>, vector<16x32xf32>
      %c0_12 = arith.constant 0 : index
      %c0_13 = arith.constant 0 : index
      %13 = vector.load %arg5[%c0_12, %c0_13] : memref<1x32xf32, #tpu.memory_space<vmem>>, vector<1x32xf32>
      %14 = vector.broadcast %13 : vector<1x32xf32> to vector<16x32xf32>
      %15 = arith.addf %12, %14 : vector<16x32xf32>
      %c0_14 = arith.constant 0 : index
      %c0_15 = arith.constant 0 : index
      %16 = vector.load %arg6[%c0_14, %c0_15] : memref<16x32xf32, #tpu.memory_space<vmem>>, vector<16x32xf32>
      tpu.vector_store %arg6[%c0_14, %c0_15], %15 {strides = array<i32>} : memref<16x32xf32, #tpu.memory_space<vmem>>, vector<16x32xf32>,
    } else {
    }
    return
  }
  func.func @transform_0(%arg0: i32, %arg1: i32, %arg2: i32) -> (i32, i32) {
    %c0_i32 = arith.constant 0 : i32
    return %arg0, %arg2 : i32, i32
  }
  func.func @transform_1(%arg0: i32, %arg1: i32, %arg2: i32) -> (i32, i32) {
    %c0_i32 = arith.constant 0 : i32
    return %arg1, %arg2 : i32, i32
  }
  func.func @transform_2(%arg0: i32, %arg1: i32, %arg2: i32) -> (i32, i32) {
    %c0_i32 = arith.constant 0 : i32
    %c0_i32_0 = arith.constant 0 : i32
    return %c0_i32, %arg1 : i32, i32
  }
  func.func @transform_3(%arg0: i32, %arg1: i32, %arg2: i32) -> (i32, i32) {
    %c0_i32 = arith.constant 0 : i32
    return %arg0, %arg1 : i32, i32
  }
}

</mosaic_0001>

<llo_original>
// kernel: fuser_forward.5
$region0: #{fuser_forward.5}
  #allocation0 [shape = 'u32[]', space=smem, size = 0x4, offset = 0x4, fixed_abs, tag = 'smem constant byte address 0x4 - core index']
  #allocation1 [shape = 'u32[72,128]{1,0:T(1,128)}', space=vmem, size = 0x9000, scoped, tag = 'internal scratch']
  #allocation2 [shape = 'f32[16,32]{1,0:T(8,128)}', space=vmem, size = 0x2000, scoped, tag = 'scratch operand']
  #allocation3 [shape = 'f32[16,32]{1,0:T(8,128)}', space=vmem, size = 0x2000, scoped, tag = 'scratch operand']
  %s0 = inlined_call_operand.hbm [shape: f32[16,32], index: 0, kind: input, shape index: {}]
  %s1 = inlined_call_operand.vmem [shape: f32[32,32], index: 1, kind: input, shape index: {}]
  %s2 = inlined_call_operand.vmem [shape: f32[32,32], index: 2, kind: input, shape index: {}]
  %s3 = inlined_call_operand.vmem [shape: f32[1,32], index: 3, kind: input, shape index: {}]
  %s4 = inlined_call_operand.vmem [shape: f32[1,32], index: 4, kind: input, shape index: {}]
  %s5 = inlined_call_operand.vmem [shape: f32[16,32], index: 5, kind: output, shape index: {0}]
  %s6 = inlined_call_operand.vmem [shape: f32[16,32], index: 6, kind: output, shape index: {1}]
  %7 = xla_tuple %s5, %s6
  %s8 = sld [smem:[#allocation0]]
  $region50: #{fuser_forward.5} parent=0
    _
  %s10 = ssub.s32 1, %s8
  %s11 = scalar_select 0, %s10, %s8
  $region1: #{fuser_forward.5} parent=0
    #allocation4 [shape = 'u8[8192]{0}', space=vmem, size = 0x2000, scoped, tag = 'input window, operand 0, single buffered']
    #allocation5 [shape = 's32[1]{0}', space=sflag, size = 0x4, scoped, tag = 'scoped memory for fuser_forward.5']
    %12 = vsyncpa [#allocation5], 0
    // Predicated region
    $region2: #{fuser_forward.5} parent=1 // pred_check
      _
    $region3: #{fuser_forward.5} parent=1 // pred_check_branch
      %14 = sbr.rel (0) target = $region5
    $region4: #{fuser_forward.5} parent=1 // pred_region
      %16 = vsyncadd [#allocation5], 0
      %s17 = sshll.u32 %s0, 4
      %s18 = int_to_ptr.hbm [resolvable:$true] %s17
      %s19 = sshll.u32 [#allocation4], 4
      %s20 = int_to_ptr.vmem [resolvable:$true] %s19
      %25 = dma.hbm_to_vmem [thread:$0]  %s18, 256, %s20, [#allocation5], 128, 128, 8
    $region5: #{fuser_forward.5} parent=1 // pred_fallthru
      _
    // Predicated region
    $region6: #{fuser_forward.5} parent=1 // pred_check
      _
    $region7: #{fuser_forward.5} parent=1 // pred_check_branch
      %27 = sbr.rel (0) target = $region9
    $region8: #{fuser_forward.5} parent=1 // pred_region
      _
    $region9: #{fuser_forward.5} parent=1 // pred_fallthru
      _
    // Predicated region
    $region10: #{fuser_forward.5} parent=1 // pred_check
      _
    $region11: #{fuser_forward.5} parent=1 // pred_check_branch
      %29 = sbr.rel (0) target = $region13
    $region12: #{fuser_forward.5} parent=1 // pred_region
      _
    $region13: #{fuser_forward.5} parent=1 // pred_fallthru
      _
    // Predicated region
    $region14: #{fuser_forward.5} parent=1 // pred_check
      _
    $region15: #{fuser_forward.5} parent=1 // pred_check_branch
      %31 = sbr.rel (0) target = $region17
    $region16: #{fuser_forward.5} parent=1 // pred_region
      _
    $region17: #{fuser_forward.5} parent=1 // pred_fallthru
      _
    // Predicated region
    $region18: #{fuser_forward.5} parent=1 // pred_check
      _
    $region19: #{fuser_forward.5} parent=1 // pred_check_branch
      %33 = sbr.rel (0) target = $region21
    $region20: #{fuser_forward.5} parent=1 // pred_region
      _
    $region21: #{fuser_forward.5} parent=1 // pred_fallthru
      _
    // Predicated region
    $region22: #{fuser_forward.5} parent=1 // pred_check
      _
    $region23: #{fuser_forward.5} parent=1 // pred_check_branch
      %35 = sbr.rel (0) target = $region25
    $region24: #{fuser_forward.5} parent=1 // pred_region
      %37 = dma.done [#allocation5], 256
    $region25: #{fuser_forward.5} parent=1 // pred_fallthru
      _
    %p38 = scmp.eq.s32.totalorder 0, 0
    // Predicated region
    $region26: #{fuser_forward.5} parent=1 // pred_check
      %p39 = pneg %p38
    $region27: #{fuser_forward.5} parent=1 // pred_check_branch
      %41 = sbr.rel (%p39) target = $region29
    $region28: #{fuser_forward.5} parent=1 // pred_region
      %vm42 = vcmask 261120
      %43 = vst.msk [vmem:[#allocation2] sm:$0xff] %vm42, 0.0
      %44 = vst.msk [vmem:[#allocation2 + $0x8] sm:$0xff] %vm42, 0.0
      %45 = vst.msk [vmem:[#allocation3] sm:$0xff] %vm42, 0.0
      %46 = vst.msk [vmem:[#allocation3 + $0x8] sm:$0xff] %vm42, 0.0
    $region29: #{fuser_forward.5} parent=1 // pred_fallthru
      _
    %v47 = vld [vmem:[#allocation4] sm:$0xff]
    %v48 = vld [vmem:[#allocation4 + $0x8] sm:$0xff]
    %v49 = vld [vmem:[#allocation2] sm:$0xff]
    %v50 = vld [vmem:[#allocation2 + $0x8] sm:$0xff]
    %v51 = vld [vmem:[%s1] sm:$0xff]
    %v52 = vld [vmem:[%s1 + $0x8] sm:$0xff]
    %v53 = vld [vmem:[%s1 + $0x10] sm:$0xff]
    %v54 = vld [vmem:[%s1 + $0x18] sm:$0xff]
    %vm55 = vcmask 261120
    %v57 = vsel %vm55, %v47, 0
    %v60 = vsel %vm55, %v48, 0
    %v63 = vsel %vm55, %v51, 0
    %v66 = vsel %vm55, %v52, 0
    %v69 = vsel %vm55, %v53, 0
    %v72 = vsel %vm55, %v54, 0
    %74 = vmatpush.xpose.msra.mxu0 0.0
    %75 = vmatpush.xpose.msra.mxu0 0.0
    %76 = vmatpush.xpose.msra.mxu0 0.0
    %77 = vmatpush.xpose.msra.mxu0 0.0
    %78 = vmatpush.xpose.msra.mxu0 0.0
    %79 = vmatpush.xpose.msra.mxu0 0.0
    %80 = vmatpush.xpose.msra.mxu0 0.0
    %81 = vmatpush.xpose.msra.mxu0 0.0
    %82 = vmatpush.xpose.msra.mxu0 0.0
    %83 = vmatpush.xpose.msra.mxu0 0.0
    %84 = vmatpush.xpose.msra.mxu0 0.0
    %85 = vmatpush.xpose.msra.mxu0 0.0
    %86 = vmatpush.xpose.msra.mxu0 %v72
    %87 = vmatpush.xpose.msra.mxu0 %v69
    %88 = vmatpush.xpose.msra.mxu0 %v66
    %89 = vmatpush.xpose.msra.mxu0 %v63
    %90 = vmatmul.f32.gmra.mxu0 %v57
    %v91 = vpop.f32.mrf.mxu0
    %v92 = vadd.f32 0.0, %v91
    %93 = vmatmul.f32.gmra.mxu0 %v60
    %v94 = vpop.f32.mrf.mxu0
    %v95 = vadd.f32 0.0, %v94
    %96 = vdwg.mxu0
    %v97 = vadd.f32 %v49, %v92
    %v98 = vadd.f32 %v50, %v95
    %99 = vst.msk [vmem:[#allocation2] sm:$0xff] %vm55, %v97
    %100 = vst.msk [vmem:[#allocation2 + $0x8] sm:$0xff] %vm55, %v98
    %v101 = vld [vmem:[#allocation3] sm:$0xff]
    %v102 = vld [vmem:[#allocation3 + $0x8] sm:$0xff]
    %v103 = vld [vmem:[%s2] sm:$0xff]
    %v104 = vld [vmem:[%s2 + $0x8] sm:$0xff]
    %v105 = vld [vmem:[%s2 + $0x10] sm:$0xff]
    %v106 = vld [vmem:[%s2 + $0x18] sm:$0xff]
    %v108 = vsel %vm55, %v103, 0
    %v111 = vsel %vm55, %v104, 0
    %v114 = vsel %vm55, %v105, 0
    %v117 = vsel %vm55, %v106, 0
    %119 = vmatpush.xpose.msra.mxu0 0.0
    %120 = vmatpush.xpose.msra.mxu0 0.0
    %121 = vmatpush.xpose.msra.mxu0 0.0
    %122 = vmatpush.xpose.msra.mxu0 0.0
    %123 = vmatpush.xpose.msra.mxu0 0.0
    %124 = vmatpush.xpose.msra.mxu0 0.0
    %125 = vmatpush.xpose.msra.mxu0 0.0
    %126 = vmatpush.xpose.msra.mxu0 0.0
    %127 = vmatpush.xpose.msra.mxu0 0.0
    %128 = vmatpush.xpose.msra.mxu0 0.0
    %129 = vmatpush.xpose.msra.mxu0 0.0
    %130 = vmatpush.xpose.msra.mxu0 0.0
    %131 = vmatpush.xpose.msra.mxu0 %v117
    %132 = vmatpush.xpose.msra.mxu0 %v114
    %133 = vmatpush.xpose.msra.mxu0 %v111
    %134 = vmatpush.xpose.msra.mxu0 %v108
    %135 = vmatmul.f32.gmra.mxu0 %v57
    %v136 = vpop.f32.mrf.mxu0
    %v137 = vadd.f32 0.0, %v136
    %138 = vmatmul.f32.gmra.mxu0 %v60
    %v139 = vpop.f32.mrf.mxu0
    %v140 = vadd.f32 0.0, %v139
    %141 = vdwg.mxu0
    %v142 = vadd.f32 %v101, %v137
    %v143 = vadd.f32 %v102, %v140
    %144 = vst.msk [vmem:[#allocation3] sm:$0xff] %vm55, %v142
    %145 = vst.msk [vmem:[#allocation3 + $0x8] sm:$0xff] %vm55, %v143
    // Predicated region
    $region30: #{fuser_forward.5} parent=1 // pred_check
      %p146 = pneg %p38
    $region31: #{fuser_forward.5} parent=1 // pred_check_branch
      %148 = sbr.rel (%p146) target = $region33
    $region32: #{fuser_forward.5} parent=1 // pred_region
      %v149 = vld [vmem:[#allocation2] sm:$0xff]
      %v150 = vld [vmem:[#allocation2 + $0x8] sm:$0xff]
      %v151 = vld [vmem:[%s3] sm:$0x1]
      %v153 = vperm.slane %v151, 0
      %v155 = vadd.f32 %v149, %v153
      %v156 = vadd.f32 %v150, %v153
      %157 = vst.msk [vmem:[%s5] sm:$0xff] %vm55, %v155
      %158 = vst.msk [vmem:[%s5 + $0x8] sm:$0xff] %vm55, %v156
      %v159 = vld [vmem:[#allocation3] sm:$0xff]
      %v160 = vld [vmem:[#allocation3 + $0x8] sm:$0xff]
      %v161 = vld [vmem:[%s4] sm:$0x1]
      %v163 = vperm.slane %v161, 0
      %v165 = vadd.f32 %v159, %v163
      %v166 = vadd.f32 %v160, %v163
      %167 = vst.msk [vmem:[%s6] sm:$0xff] %vm55, %v165
      %168 = vst.msk [vmem:[%s6 + $0x8] sm:$0xff] %vm55, %v166
    $region33: #{fuser_forward.5} parent=1 // pred_fallthru
      _
    // Predicated region
    $region34: #{fuser_forward.5} parent=1 // pred_check
      _
    $region35: #{fuser_forward.5} parent=1 // pred_check_branch
      %170 = sbr.rel (0) target = $region37
    $region36: #{fuser_forward.5} parent=1 // pred_region
      _
    $region37: #{fuser_forward.5} parent=1 // pred_fallthru
      _
    // Predicated region
    $region38: #{fuser_forward.5} parent=1 // pred_check
      _
    $region39: #{fuser_forward.5} parent=1 // pred_check_branch
      %172 = sbr.rel (0) target = $region41
    $region40: #{fuser_forward.5} parent=1 // pred_region
      _
    $region41: #{fuser_forward.5} parent=1 // pred_fallthru
      _
    // Predicated region
    $region42: #{fuser_forward.5} parent=1 // pred_check
      _
    $region43: #{fuser_forward.5} parent=1 // pred_check_branch
      %174 = sbr.rel (0) target = $region45
    $region44: #{fuser_forward.5} parent=1 // pred_region
      _
    $region45: #{fuser_forward.5} parent=1 // pred_fallthru
      _
    // Predicated region
    $region46: #{fuser_forward.5} parent=1 // pred_check
      _
    $region47: #{fuser_forward.5} parent=1 // pred_check_branch
      %176 = sbr.rel (0) target = $region49
    $region48: #{fuser_forward.5} parent=1 // pred_region
      _
    $region49: #{fuser_forward.5} parent=1 // pred_fallthru
      _
    %177 = vsyncpa [#allocation5], 1

// kernel: fuser_forward.4
$region0: #{fuser_forward.4}
  #allocation0 [shape = 'u32[]', space=smem, size = 0x4, offset = 0x4, fixed_abs, tag = 'smem constant byte address 0x4 - core index']
  #allocation1 [shape = 'u32[72,128]{1,0:T(1,128)}', space=vmem, size = 0x9000, scoped, tag = 'internal scratch']
  #allocation2 [shape = 'f32[16,32]{1,0:T(8,128)}', space=vmem, size = 0x2000, scoped, tag = 'scratch operand']
  %s0 = inlined_call_operand.hbm [shape: f32[16,32], index: 0, kind: input, shape index: {}]
  %s1 = inlined_call_operand.hbm [shape: f32[32,32], index: 1, kind: input, shape index: {}]
  %s2 = inlined_call_operand.vmem [shape: f32[1,32], index: 2, kind: input, shape index: {}]
  %s3 = inlined_call_operand.vmem [shape: f32[16,32], index: 3, kind: output, shape index: {}]
  %s4 = sld [smem:[#allocation0]]
  $region38: #{fuser_forward.4} parent=0
    _
  %s6 = ssub.s32 1, %s4
  %s7 = scalar_select 0, %s6, %s4
  $region1: #{fuser_forward.4} parent=0
    #allocation3 [shape = 'u8[8192]{0}', space=vmem, size = 0x2000, scoped, tag = 'input window, operand 0, single buffered']
    #allocation4 [shape = 's32[1]{0}', space=sflag, size = 0x4, scoped, tag = 'scoped memory for fuser_forward.4']
    #allocation5 [shape = 'u8[16384]{0}', space=vmem, size = 0x4000, scoped, tag = 'input window, operand 1, single buffered']
    #allocation6 [shape = 's32[1]{0}', space=sflag, size = 0x4, scoped, tag = 'scoped memory for fuser_forward.4']
    %8 = vsyncpa [#allocation4], 0
    %9 = vsyncpa [#allocation6], 0
    // Predicated region
    $region2: #{fuser_forward.4} parent=1 // pred_check
      _
    $region3: #{fuser_forward.4} parent=1 // pred_check_branch
      %11 = sbr.rel (0) target = $region5
    $region4: #{fuser_forward.4} parent=1 // pred_region
      %13 = vsyncadd [#allocation4], 0
      %s14 = sshll.u32 %s0, 4
      %s15 = int_to_ptr.hbm [resolvable:$true] %s14
      %s16 = sshll.u32 [#allocation3], 4
      %s17 = int_to_ptr.vmem [resolvable:$true] %s16
      %22 = dma.hbm_to_vmem [thread:$0]  %s15, 256, %s17, [#allocation4], 128, 128, 8
    $region5: #{fuser_forward.4} parent=1 // pred_fallthru
      _
    // Predicated region
    $region6: #{fuser_forward.4} parent=1 // pred_check
      _
    $region7: #{fuser_forward.4} parent=1 // pred_check_branch
      %24 = sbr.rel (0) target = $region9
    $region8: #{fuser_forward.4} parent=1 // pred_region
      %26 = vsyncadd [#allocation6], 0
      %s27 = sshll.u32 %s1, 4
      %s28 = int_to_ptr.hbm [resolvable:$true] %s27
      %s29 = sshll.u32 [#allocation5], 4
      %s30 = int_to_ptr.vmem [resolvable:$true] %s29
      %35 = dma.hbm_to_vmem [thread:$0]  %s28, 512, %s30, [#allocation6], 128, 128, 8
    $region9: #{fuser_forward.4} parent=1 // pred_fallthru
      _
    // Predicated region
    $region10: #{fuser_forward.4} parent=1 // pred_check
      _
    $region11: #{fuser_forward.4} parent=1 // pred_check_branch
      %37 = sbr.rel (0) target = $region13
    $region12: #{fuser_forward.4} parent=1 // pred_region
      _
    $region13: #{fuser_forward.4} parent=1 // pred_fallthru
      _
    // Predicated region
    $region14: #{fuser_forward.4} parent=1 // pred_check
      _
    $region15: #{fuser_forward.4} parent=1 // pred_check_branch
      %39 = sbr.rel (0) target = $region17
    $region16: #{fuser_forward.4} parent=1 // pred_region
      %41 = dma.done [#allocation4], 256
    $region17: #{fuser_forward.4} parent=1 // pred_fallthru
      _
    // Predicated region
    $region18: #{fuser_forward.4} parent=1 // pred_check
      _
    $region19: #{fuser_forward.4} parent=1 // pred_check_branch
      %43 = sbr.rel (0) target = $region21
    $region20: #{fuser_forward.4} parent=1 // pred_region
      %45 = dma.done [#allocation6], 512
    $region21: #{fuser_forward.4} parent=1 // pred_fallthru
      _
    %p46 = scmp.eq.s32.totalorder 0, 0
    // Predicated region
    $region22: #{fuser_forward.4} parent=1 // pred_check
      %p47 = pneg %p46
    $region23: #{fuser_forward.4} parent=1 // pred_check_branch
      %49 = sbr.rel (%p47) target = $region25
    $region24: #{fuser_forward.4} parent=1 // pred_region
      %vm50 = vcmask 261120
      %51 = vst.msk [vmem:[#allocation2] sm:$0xff] %vm50, 0.0
      %52 = vst.msk [vmem:[#allocation2 + $0x8] sm:$0xff] %vm50, 0.0
    $region25: #{fuser_forward.4} parent=1 // pred_fallthru
      _
    %v53 = vld [vmem:[#allocation2] sm:$0xff]
    %v54 = vld [vmem:[#allocation2 + $0x8] sm:$0xff]
    %v55 = vld [vmem:[#allocation3] sm:$0xff]
    %v56 = vld [vmem:[#allocation3 + $0x8] sm:$0xff]
    %v57 = vld [vmem:[#allocation5] sm:$0xff]
    %v58 = vld [vmem:[#allocation5 + $0x8] sm:$0xff]
    %v59 = vld [vmem:[#allocation5 + $0x10] sm:$0xff]
    %v60 = vld [vmem:[#allocation5 + $0x18] sm:$0xff]
    %vm61 = vcmask 261120
    %v63 = vsel %vm61, %v55, 0
    %v66 = vsel %vm61, %v56, 0
    %v69 = vsel %vm61, %v57, 0
    %v72 = vsel %vm61, %v58, 0
    %v75 = vsel %vm61, %v59, 0
    %v78 = vsel %vm61, %v60, 0
    %80 = vmatpush.xpose.msra.mxu0 0.0
    %81 = vmatpush.xpose.msra.mxu0 0.0
    %82 = vmatpush.xpose.msra.mxu0 0.0
    %83 = vmatpush.xpose.msra.mxu0 0.0
    %84 = vmatpush.xpose.msra.mxu0 0.0
    %85 = vmatpush.xpose.msra.mxu0 0.0
    %86 = vmatpush.xpose.msra.mxu0 0.0
    %87 = vmatpush.xpose.msra.mxu0 0.0
    %88 = vmatpush.xpose.msra.mxu0 0.0
    %89 = vmatpush.xpose.msra.mxu0 0.0
    %90 = vmatpush.xpose.msra.mxu0 0.0
    %91 = vmatpush.xpose.msra.mxu0 0.0
    %92 = vmatpush.xpose.msra.mxu0 %v78
    %93 = vmatpush.xpose.msra.mxu0 %v75
    %94 = vmatpush.xpose.msra.mxu0 %v72
    %95 = vmatpush.xpose.msra.mxu0 %v69
    %96 = vmatmul.f32.gmra.mxu0 %v63
    %v97 = vpop.f32.mrf.mxu0
    %v98 = vadd.f32 0.0, %v97
    %99 = vmatmul.f32.gmra.mxu0 %v66
    %v100 = vpop.f32.mrf.mxu0
    %v101 = vadd.f32 0.0, %v100
    %102 = vdwg.mxu0
    %v103 = vadd.f32 %v53, %v98
    %v104 = vadd.f32 %v54, %v101
    %105 = vst.msk [vmem:[#allocation2] sm:$0xff] %vm61, %v103
    %106 = vst.msk [vmem:[#allocation2 + $0x8] sm:$0xff] %vm61, %v104
    // Predicated region
    $region26: #{fuser_forward.4} parent=1 // pred_check
      %p107 = pneg %p46
    $region27: #{fuser_forward.4} parent=1 // pred_check_branch
      %109 = sbr.rel (%p107) target = $region29
    $region28: #{fuser_forward.4} parent=1 // pred_region
      %v110 = vld [vmem:[#allocation2] sm:$0xff]
      %v111 = vld [vmem:[#allocation2 + $0x8] sm:$0xff]
      %v112 = vld [vmem:[%s2] sm:$0x1]
      %v114 = vperm.slane %v112, 0
      %v116 = vadd.f32 %v110, %v114
      %v117 = vadd.f32 %v111, %v114
      %v118 = vmul.f32 %v116, 0.5
      %v119 = vmul.f32 %v117, 0.5
      %120 = vst.msk [vmem:[%s3] sm:$0xff] %vm61, %v118
      %121 = vst.msk [vmem:[%s3 + $0x8] sm:$0xff] %vm61, %v119
    $region29: #{fuser_forward.4} parent=1 // pred_fallthru
      _
    // Predicated region
    $region30: #{fuser_forward.4} parent=1 // pred_check
      _
    $region31: #{fuser_forward.4} parent=1 // pred_check_branch
      %123 = sbr.rel (0) target = $region33
    $region32: #{fuser_forward.4} parent=1 // pred_region
      _
    $region33: #{fuser_forward.4} parent=1 // pred_fallthru
      _
    // Predicated region
    $region34: #{fuser_forward.4} parent=1 // pred_check
      _
    $region35: #{fuser_forward.4} parent=1 // pred_check_branch
      %125 = sbr.rel (0) target = $region37
    $region36: #{fuser_forward.4} parent=1 // pred_region
      _
    $region37: #{fuser_forward.4} parent=1 // pred_fallthru
      _
    %126 = vsyncpa [#allocation4], 1
    %127 = vsyncpa [#allocation6], 1

// kernel: fuser_forward.7
$region0: #{fuser_forward.7}
  #allocation0 [shape = 'u32[]', space=smem, size = 0x4, offset = 0x4, fixed_abs, tag = 'smem constant byte address 0x4 - core index']
  #allocation1 [shape = 'u32[72,128]{1,0:T(1,128)}', space=vmem, size = 0x9000, scoped, tag = 'internal scratch']
  #allocation2 [shape = 'f32[16,32]{1,0:T(8,128)}', space=vmem, size = 0x2000, scoped, tag = 'scratch operand']
  %s0 = inlined_call_operand.vmem [shape: f32[16,32], index: 0, kind: input, shape index: {}]
  %s1 = inlined_call_operand.vmem [shape: f32[32,32], index: 1, kind: input, shape index: {}]
  %s2 = inlined_call_operand.vmem [shape: f32[1,32], index: 2, kind: input, shape index: {}]
  %s3 = inlined_call_operand.hbm [shape: f32[16,32], index: 3, kind: output, shape index: {}]
  %s4 = sld [smem:[#allocation0]]
  $region30: #{fuser_forward.7} parent=0
    _
  %s6 = ssub.s32 1, %s4
  %s7 = scalar_select 0, %s6, %s4
  $region1: #{fuser_forward.7} parent=0
    #allocation3 [shape = 'u8[8192]{0}', space=vmem, size = 0x2000, scoped, tag = 'output window, operand 0, single buffered']
    #allocation4 [shape = 's32[1]{0}', space=sflag, size = 0x4, scoped, tag = 'scoped memory for fuser_forward.7']
    %8 = vsyncpa [#allocation4], 0
    // Predicated region
    $region2: #{fuser_forward.7} parent=1 // pred_check
      _
    $region3: #{fuser_forward.7} parent=1 // pred_check_branch
      %10 = sbr.rel (0) target = $region5
    $region4: #{fuser_forward.7} parent=1 // pred_region
      _
    $region5: #{fuser_forward.7} parent=1 // pred_fallthru
      _
    // Predicated region
    $region6: #{fuser_forward.7} parent=1 // pred_check
      _
    $region7: #{fuser_forward.7} parent=1 // pred_check_branch
      %12 = sbr.rel (0) target = $region9
    $region8: #{fuser_forward.7} parent=1 // pred_region
      _
    $region9: #{fuser_forward.7} parent=1 // pred_fallthru
      _
    // Predicated region
    $region10: #{fuser_forward.7} parent=1 // pred_check
      _
    $region11: #{fuser_forward.7} parent=1 // pred_check_branch
      %14 = sbr.rel (0) target = $region13
    $region12: #{fuser_forward.7} parent=1 // pred_region
      _
    $region13: #{fuser_forward.7} parent=1 // pred_fallthru
      _
    %p15 = scmp.eq.s32.totalorder 0, 0
    // Predicated region
    $region14: #{fuser_forward.7} parent=1 // pred_check
      %p16 = pneg %p15
    $region15: #{fuser_forward.7} parent=1 // pred_check_branch
      %18 = sbr.rel (%p16) target = $region17
    $region16: #{fuser_forward.7} parent=1 // pred_region
      %vm19 = vcmask 261120
      %20 = vst.msk [vmem:[#allocation2] sm:$0xff] %vm19, 0.0
      %21 = vst.msk [vmem:[#allocation2 + $0x8] sm:$0xff] %vm19, 0.0
    $region17: #{fuser_forward.7} parent=1 // pred_fallthru
      _
    %v22 = vld [vmem:[#allocation2] sm:$0xff]
    %v23 = vld [vmem:[#allocation2 + $0x8] sm:$0xff]
    %v24 = vld [vmem:[%s0] sm:$0xff]
    %v25 = vld [vmem:[%s0 + $0x8] sm:$0xff]
    %v26 = vld [vmem:[%s1] sm:$0xff]
    %v27 = vld [vmem:[%s1 + $0x8] sm:$0xff]
    %v28 = vld [vmem:[%s1 + $0x10] sm:$0xff]
    %v29 = vld [vmem:[%s1 + $0x18] sm:$0xff]
    %vm30 = vcmask 261120
    %v32 = vsel %vm30, %v24, 0
    %v35 = vsel %vm30, %v25, 0
    %v38 = vsel %vm30, %v26, 0
    %v41 = vsel %vm30, %v27, 0
    %v44 = vsel %vm30, %v28, 0
    %v47 = vsel %vm30, %v29, 0
    %49 = vmatpush.xpose.msra.mxu0 0.0
    %50 = vmatpush.xpose.msra.mxu0 0.0
    %51 = vmatpush.xpose.msra.mxu0 0.0
    %52 = vmatpush.xpose.msra.mxu0 0.0
    %53 = vmatpush.xpose.msra.mxu0 0.0
    %54 = vmatpush.xpose.msra.mxu0 0.0
    %55 = vmatpush.xpose.msra.mxu0 0.0
    %56 = vmatpush.xpose.msra.mxu0 0.0
    %57 = vmatpush.xpose.msra.mxu0 0.0
    %58 = vmatpush.xpose.msra.mxu0 0.0
    %59 = vmatpush.xpose.msra.mxu0 0.0
    %60 = vmatpush.xpose.msra.mxu0 0.0
    %61 = vmatpush.xpose.msra.mxu0 %v47
    %62 = vmatpush.xpose.msra.mxu0 %v44
    %63 = vmatpush.xpose.msra.mxu0 %v41
    %64 = vmatpush.xpose.msra.mxu0 %v38
    %65 = vmatmul.f32.gmra.mxu0 %v32
    %v66 = vpop.f32.mrf.mxu0
    %v67 = vadd.f32 0.0, %v66
    %68 = vmatmul.f32.gmra.mxu0 %v35
    %v69 = vpop.f32.mrf.mxu0
    %v70 = vadd.f32 0.0, %v69
    %71 = vdwg.mxu0
    %v72 = vadd.f32 %v22, %v67
    %v73 = vadd.f32 %v23, %v70
    %74 = vst.msk [vmem:[#allocation2] sm:$0xff] %vm30, %v72
    %75 = vst.msk [vmem:[#allocation2 + $0x8] sm:$0xff] %vm30, %v73
    // Predicated region
    $region18: #{fuser_forward.7} parent=1 // pred_check
      %p76 = pneg %p15
    $region19: #{fuser_forward.7} parent=1 // pred_check_branch
      %78 = sbr.rel (%p76) target = $region21
    $region20: #{fuser_forward.7} parent=1 // pred_region
      %v79 = vld [vmem:[#allocation2] sm:$0xff]
      %v80 = vld [vmem:[#allocation2 + $0x8] sm:$0xff]
      %v81 = vld [vmem:[%s2] sm:$0x1]
      %v83 = vperm.slane %v81, 0
      %v85 = vadd.f32 %v79, %v83
      %v86 = vadd.f32 %v80, %v83
      %87 = vst.msk [vmem:[#allocation3] sm:$0xff] %vm30, %v85
      %88 = vst.msk [vmem:[#allocation3 + $0x8] sm:$0xff] %vm30, %v86
    $region21: #{fuser_forward.7} parent=1 // pred_fallthru
      _
    // Predicated region
    $region22: #{fuser_forward.7} parent=1 // pred_check
      _
    $region23: #{fuser_forward.7} parent=1 // pred_check_branch
      %90 = sbr.rel (0) target = $region25
    $region24: #{fuser_forward.7} parent=1 // pred_region
      %92 = vsyncadd [#allocation4], 0
      %s93 = sshll.u32 [#allocation3], 4
      %s94 = int_to_ptr.vmem [resolvable:$true] %s93
      %s95 = sshll.u32 %s3, 4
      %s96 = int_to_ptr.hbm [resolvable:$true] %s95
      %101 = dma.vmem_to_hbm [thread:$0]  %s94, 256, %s96, [#allocation4], 128, 128, 8
    $region25: #{fuser_forward.7} parent=1 // pred_fallthru
      _
    // Predicated region
    $region26: #{fuser_forward.7} parent=1 // pred_check
      _
    $region27: #{fuser_forward.7} parent=1 // pred_check_branch
      %103 = sbr.rel (0) target = $region29
    $region28: #{fuser_forward.7} parent=1 // pred_region
      %105 = dma.done [#allocation4], 256
    $region29: #{fuser_forward.7} parent=1 // pred_fallthru
      _
    %106 = vsyncpa [#allocation4], 1

// kernel: fuser_forward.6
$region0: #{fuser_forward.6}
  #allocation0 [shape = 'u32[]', space=smem, size = 0x4, offset = 0x4, fixed_abs, tag = 'smem constant byte address 0x4 - core index']
  #allocation1 [shape = 'u32[72,128]{1,0:T(1,128)}', space=vmem, size = 0x9000, scoped, tag = 'internal scratch']
  %s0 = inlined_call_operand.vmem [shape: f32[16,8,4], index: 0, kind: input, shape index: {}]
  %s1 = inlined_call_operand.vmem [shape: f32[16,8,4], index: 1, kind: input, shape index: {}]
  %s2 = inlined_call_operand.vmem [shape: f32[16,8,4], index: 2, kind: input, shape index: {}]
  %s3 = inlined_call_operand.vmem [shape: f32[2,8,32], index: 3, kind: output, shape index: {}]
  %s4 = sld [smem:[#allocation0]]
  $region45: #{fuser_forward.6} parent=0
    _
  %s6 = ssub.s32 1, %s4
  %s7 = scalar_select 0, %s6, %s4
  loop: start=0, step=1, limit=4
  $region2: #{fuser_forward.6} parent=0 // loop_pre_header
    _
  $region3: #{fuser_forward.6} parent=0 // loop_header
    %s9 = sphi 0, %s13
    %p10 = scmp.ge.s32.totalorder %s9, 4
    %s19 = sphi 0, %s21
    %s22 = sphi 0, %s19
    %s23 = sphi 0, %s22
    %s39 = sphi 0, %s23
    %s45 = sphi 0, %s47
    %s48 = sphi 0, %s45
    %s49 = sphi 0, %s48
    %s65 = sphi 0, %s49
    %s71 = sphi 0, %s73
    %s74 = sphi 0, %s71
    %s75 = sphi 0, %s74
    %s91 = sphi 0, %s75
    %s97 = sphi 0, %s99
    %s100 = sphi 0, %s97
    %s101 = sphi 0, %s100
    %s117 = sphi 0, %s101
  $region4: #{fuser_forward.6} parent=0 // loop_header_branch
    %12 = sbr.rel (%p10) target = $region8
  $region5: #{fuser_forward.6} parent=0 // loop_body
    %s14 = ssub.s32 %s9, 1
    %s15 = ssub.s32 %s9, 2
    %s16 = sadd.s32 %s9, 1
    %s17 = ssub.s32 %s9, %s16
    %p18 = scmp.eq.s32.totalorder %s17, 0
    %s20 = sadd.s32 %s19, 1
    %s21 = scalar_select %p18, %s19, %s20
    %p24 = pneg %p18
    %p25 = scmp.eq.s32.totalorder %s9, 1
    %p26 = por %p24, %p25
    %p27 = scmp.ne.s32.totalorder %s19, %s22
    %p28 = scmp.eq.s32.totalorder %s9, 0
    %p29 = por %p27, %p28
    %p30 = scmp.ne.s32.totalorder %s19, %s22
    %p31 = scmp.eq.s32.totalorder %s14, 1
    %p32 = por %p30, %p31
    %p33 = scmp.ne.s32.totalorder %s22, %s23
    %p34 = scmp.eq.s32.totalorder %s14, 0
    %p35 = por %p33, %p34
    %p36 = scmp.ne.s32.totalorder %s22, %s23
    %p37 = scmp.eq.s32.totalorder %s15, 1
    %p38 = por %p36, %p37
    %p40 = scmp.ne.s32.totalorder %s23, %s39
    %p41 = scmp.eq.s32.totalorder %s15, 0
    %p42 = por %p40, %p41
    %s43 = ssub.s32 %s9, %s16
    %p44 = scmp.eq.s32.totalorder %s43, 0
    %s46 = sadd.s32 %s45, 1
    %s47 = scalar_select %p44, %s45, %s46
    %p50 = pneg %p44
    %p51 = scmp.eq.s32.totalorder %s9, 1
    %p52 = por %p50, %p51
    %p53 = scmp.ne.s32.totalorder %s45, %s48
    %p54 = scmp.eq.s32.totalorder %s9, 0
    %p55 = por %p53, %p54
    %p56 = scmp.ne.s32.totalorder %s45, %s48
    %p57 = scmp.eq.s32.totalorder %s14, 1
    %p58 = por %p56, %p57
    %p59 = scmp.ne.s32.totalorder %s48, %s49
    %p60 = scmp.eq.s32.totalorder %s14, 0
    %p61 = por %p59, %p60
    %p62 = scmp.ne.s32.totalorder %s48, %s49
    %p63 = scmp.eq.s32.totalorder %s15, 1
    %p64 = por %p62, %p63
    %p66 = scmp.ne.s32.totalorder %s49, %s65
    %p67 = scmp.eq.s32.totalorder %s15, 0
    %p68 = por %p66, %p67
    %s69 = ssub.s32 %s9, %s16
    %p70 = scmp.eq.s32.totalorder %s69, 0
    %s72 = sadd.s32 %s71, 1
    %s73 = scalar_select %p70, %s71, %s72
    %p76 = pneg %p70
    %p77 = scmp.eq.s32.totalorder %s9, 1
    %p78 = por %p76, %p77
    %p79 = scmp.ne.s32.totalorder %s71, %s74
    %p80 = scmp.eq.s32.totalorder %s9, 0
    %p81 = por %p79, %p80
    %p82 = scmp.ne.s32.totalorder %s71, %s74
    %p83 = scmp.eq.s32.totalorder %s14, 1
    %p84 = por %p82, %p83
    %p85 = scmp.ne.s32.totalorder %s74, %s75
    %p86 = scmp.eq.s32.totalorder %s14, 0
    %p87 = por %p85, %p86
    %p88 = scmp.ne.s32.totalorder %s74, %s75
    %p89 = scmp.eq.s32.totalorder %s15, 1
    %p90 = por %p88, %p89
    %p92 = scmp.ne.s32.totalorder %s75, %s91
    %p93 = scmp.eq.s32.totalorder %s15, 0
    %p94 = por %p92, %p93
    %s95 = ssub.s32 %s9, %s16
    %p96 = scmp.eq.s32.totalorder %s95, 0
    %s98 = sadd.s32 %s97, 1
    %s99 = scalar_select %p96, %s97, %s98
    %p102 = pneg %p96
    %p103 = scmp.eq.s32.totalorder %s9, 1
    %p104 = por %p102, %p103
    %p105 = scmp.ne.s32.totalorder %s97, %s100
    %p106 = scmp.eq.s32.totalorder %s9, 0
    %p107 = por %p105, %p106
    %p108 = scmp.ne.s32.totalorder %s97, %s100
    %p109 = scmp.eq.s32.totalorder %s14, 1
    %p110 = por %p108, %p109
    %p111 = scmp.ne.s32.totalorder %s100, %s101
    %p112 = scmp.eq.s32.totalorder %s14, 0
    %p113 = por %p111, %p112
    %p114 = scmp.ne.s32.totalorder %s100, %s101
    %p115 = scmp.eq.s32.totalorder %s15, 1
    %p116 = por %p114, %p115
    %p118 = scmp.ne.s32.totalorder %s101, %s117
    %p119 = scmp.eq.s32.totalorder %s15, 0
    %p120 = por %p118, %p119
    %p121 = scmp.le.s32.totalorder 1, %s9
    %p122 = scmp.lt.s32.totalorder %s9, 3
    %p123 = pnand %p121, %p122
    %p124 = pneg %p123
    // Predicated region
    $region9: #{fuser_forward.6} parent=5 // pred_check
      _
    $region10: #{fuser_forward.6} parent=5 // pred_check_branch
      %126 = sbr.rel (%p123) target = $region12
    $region11: #{fuser_forward.6} parent=5 // pred_region
      %s127 = ssub.s32 %s9, 1
    $region12: #{fuser_forward.6} parent=5 // pred_fallthru
      _
    %p128 = scmp.lt.s32.totalorder %s9, 2
    // Predicated region
    $region13: #{fuser_forward.6} parent=5 // pred_check
      %p129 = pneg %p128
    $region14: #{fuser_forward.6} parent=5 // pred_check_branch
      %131 = sbr.rel (%p129) target = $region16
    $region15: #{fuser_forward.6} parent=5 // pred_region
      // Predicated region
      $region17: #{fuser_forward.6} parent=15 // pred_check
        %p132 = pneg %p29
      $region18: #{fuser_forward.6} parent=15 // pred_check_branch
        %134 = sbr.rel (%p132) target = $region20
      $region19: #{fuser_forward.6} parent=15 // pred_region
        %s135 = smul.u32 8, %s9
        %p136 = scmp.lt.s32.totalorder %s135, 15
        %s137 = scalar_select %p136, %s135, 15
        %s138 = smul.addr %s137, 8
        %s139 = scalar_lea.vmem %s0, %s138
        %s140 = smul.u32 8, %s9
      $region20: #{fuser_forward.6} parent=15 // pred_fallthru
        _
      // Predicated region
      $region21: #{fuser_forward.6} parent=15 // pred_check
        %p141 = pneg %p55
      $region22: #{fuser_forward.6} parent=15 // pred_check_branch
        %143 = sbr.rel (%p141) target = $region24
      $region23: #{fuser_forward.6} parent=15 // pred_region
        %s144 = smul.u32 8, %s9
        %p145 = scmp.lt.s32.totalorder %s144, 15
        %s146 = scalar_select %p145, %s144, 15
        %s147 = smul.addr %s146, 8
        %s148 = scalar_lea.vmem %s1, %s147
        %s149 = smul.u32 8, %s9
      $region24: #{fuser_forward.6} parent=15 // pred_fallthru
        _
      // Predicated region
      $region25: #{fuser_forward.6} parent=15 // pred_check
        %p150 = pneg %p81
      $region26: #{fuser_forward.6} parent=15 // pred_check_branch
        %152 = sbr.rel (%p150) target = $region28
      $region27: #{fuser_forward.6} parent=15 // pred_region
        %s153 = smul.u32 8, %s9
        %p154 = scmp.lt.s32.totalorder %s153, 15
        %s155 = scalar_select %p154, %s153, 15
        %s156 = smul.addr %s155, 8
        %s157 = scalar_lea.vmem %s2, %s156
        %s158 = smul.u32 8, %s9
      $region28: #{fuser_forward.6} parent=15 // pred_fallthru
        _
    $region16: #{fuser_forward.6} parent=5 // pred_fallthru
      _
    %p159 = scmp.le.s32.totalorder 1, %s9
    %p160 = scmp.lt.s32.totalorder %s9, 3
    %p161 = pnand %p159, %p160
    %p162 = pneg %p161
    // Predicated region
    $region29: #{fuser_forward.6} parent=5 // pred_check
      _
    $region30: #{fuser_forward.6} parent=5 // pred_check_branch
      %164 = sbr.rel (%p161) target = $region32
    $region31: #{fuser_forward.6} parent=5 // pred_region
      %s165 = ssub.s32 %s9, 1
      %s166 = smul.u32 8, %s14
      %p167 = scmp.lt.s32.totalorder %s166, 15
      %s168 = scalar_select %p167, %s166, 15
      %s169 = smul.addr %s168, 8
      %s170 = scalar_lea.vmem %s0, %s169
      %p171 = pneg %p35
      %p172 = pneg %p32
      %s173 = smul.u32 8, %s14
      %p174 = scmp.lt.s32.totalorder %s173, 15
      %s175 = scalar_select %p174, %s173, 15
      %s176 = smul.addr %s175, 8
      %s177 = scalar_lea.vmem %s1, %s176
      %p178 = pneg %p61
      %p179 = pneg %p58
      %s180 = smul.u32 8, %s14
      %p181 = scmp.lt.s32.totalorder %s180, 15
      %s182 = scalar_select %p181, %s180, 15
      %s183 = smul.addr %s182, 8
      %s184 = scalar_lea.vmem %s2, %s183
      %p185 = pneg %p87
      %p186 = pneg %p84
      %p187 = pneg %p113
      %p188 = pneg %p110
      %p189 = scmp.lt.s32.totalorder %s14, 1
      %s190 = scalar_select %p189, %s14, 1
      %s191 = smul.addr %s190, 8
      %s192 = scalar_lea.vmem %s3, %s191
      %s193 = smul.u32 8, %s14
      %p194 = scmp.lt.s32.totalorder %s193, 15
      %s195 = scalar_select %p194, %s193, 15
      %s196 = smul.addr %s195, 8
      %s197 = scalar_lea.vmem %s0, %s196
      %s198 = smul.u32 8, %s14
      %s199 = smul.u32 8, %s14
      %p200 = scmp.lt.s32.totalorder %s199, 15
      %s201 = scalar_select %p200, %s199, 15
      %s202 = smul.addr %s201, 8
      %s203 = scalar_lea.vmem %s1, %s202
      %s204 = smul.u32 8, %s14
      %s205 = smul.u32 8, %s14
      %p206 = scmp.lt.s32.totalorder %s205, 15
      %s207 = scalar_select %p206, %s205, 15
      %s208 = smul.addr %s207, 8
      %s209 = scalar_lea.vmem %s2, %s208
      %s210 = smul.u32 8, %s14
      %p211 = scmp.lt.s32.totalorder %s14, 1
      %s212 = scalar_select %p211, %s14, 1
      %s213 = smul.addr %s212, 8
      %s214 = scalar_lea.vmem %s3, %s213
      %v215 = vld [vmem:[%s197] sm:$0xff]
      %v216 = vld [vmem:[%s203] sm:$0xff]
      %v217 = vld [vmem:[%s209] sm:$0xff]
      %vm218 = vcmask 31744
      %v220 = vsel %vm218, %v215, 0
      %v223 = vsel %vm218, %v216, 0
      %225 = vmatpush.xpose.msra.mxu0 0.0
      %226 = vmatpush.xpose.msra.mxu0 0.0
      %227 = vmatpush.xpose.msra.mxu0 0.0
      %228 = vmatpush.xpose.msra.mxu0 0.0
      %229 = vmatpush.xpose.msra.mxu0 0.0
      %230 = vmatpush.xpose.msra.mxu0 0.0
      %231 = vmatpush.xpose.msra.mxu0 0.0
      %232 = vmatpush.xpose.msra.mxu0 0.0
      %233 = vmatpush.xpose.msra.mxu0 0.0
      %234 = vmatpush.xpose.msra.mxu0 0.0
      %235 = vmatpush.xpose.msra.mxu0 0.0
      %236 = vmatpush.xpose.msra.mxu0 0.0
      %237 = vmatpush.xpose.msra.mxu0 0.0
      %238 = vmatpush.xpose.msra.mxu0 0.0
      %239 = vmatpush.xpose.msra.mxu0 0.0
      %240 = vmatpush.xpose.msra.mxu0 %v223
      %241 = vmatmul.f32.gmra.mxu0 %v220
      %v242 = vpop.f32.mrf.mxu0
      %v243 = vadd.f32 0.0, %v242
      %244 = vdwg.mxu0
      %vm245 = vcmask 64512
      %v246 = vsel %vm245, %v243, -inf
      %247 = vmax.xlane.f32.xlu0 %v246
      %v248 = vpop.xlane.xlu0 %247
      %v249 = vsub.f32 %v243, %v248
      %v250 = vmul.f32 %v249, 1.442695
      %v251 = vpow.pop %v250
      %v252 = vsel %vm245, %v251, 0.0
      %253 = vadd.xlane.f32.xlu0 %v252
      %v254 = vpop.xlane.xlu0 %253
      %v255 = vrcp.pop %v254
      %v256 = vmul.f32 %v251, %v255
      %v258 = vsel %vm245, %v256, 0
      %260 = vmatpush.msra.mxu0 0.0
      %261 = vmatpush.msra.mxu0 0.0
      %262 = vmatpush.msra.mxu0 0.0
      %263 = vmatpush.msra.mxu0 0.0
      %264 = vmatpush.msra.mxu0 0.0
      %265 = vmatpush.msra.mxu0 0.0
      %266 = vmatpush.msra.mxu0 0.0
      %267 = vmatpush.msra.mxu0 0.0
      %268 = vmatpush.msra.mxu0 0.0
      %269 = vmatpush.msra.mxu0 0.0
      %270 = vmatpush.msra.mxu0 0.0
      %271 = vmatpush.msra.mxu0 0.0
      %272 = vmatpush.msra.mxu0 0.0
      %273 = vmatpush.msra.mxu0 0.0
      %274 = vmatpush.msra.mxu0 0.0
      %275 = vmatpush.msra.mxu0 %v217
      %276 = vmatmul.f32.gmra.mxu0 %v258
      %v277 = vpop.f32.mrf.mxu0
      %v278 = vadd.f32 0.0, %v277
      %279 = vdwg.mxu0
      %s280 = scalar_lea.vmem %s197, 8
      %v281 = vld [vmem:[%s280] sm:$0xff]
      %s282 = scalar_lea.vmem %s203, 8
      %v283 = vld [vmem:[%s282] sm:$0xff]
      %s284 = scalar_lea.vmem %s209, 8
      %v285 = vld [vmem:[%s284] sm:$0xff]
      %v287 = vsel %vm218, %v281, 0
      %v290 = vsel %vm218, %v283, 0
      %292 = vmatpush.xpose.msra.mxu0 0.0
      %293 = vmatpush.xpose.msra.mxu0 0.0
      %294 = vmatpush.xpose.msra.mxu0 0.0
      %295 = vmatpush.xpose.msra.mxu0 0.0
      %296 = vmatpush.xpose.msra.mxu0 0.0
      %297 = vmatpush.xpose.msra.mxu0 0.0
      %298 = vmatpush.xpose.msra.mxu0 0.0
      %299 = vmatpush.xpose.msra.mxu0 0.0
      %300 = vmatpush.xpose.msra.mxu0 0.0
      %301 = vmatpush.xpose.msra.mxu0 0.0
      %302 = vmatpush.xpose.msra.mxu0 0.0
      %303 = vmatpush.xpose.msra.mxu0 0.0
      %304 = vmatpush.xpose.msra.mxu0 0.0
      %305 = vmatpush.xpose.msra.mxu0 0.0
      %306 = vmatpush.xpose.msra.mxu0 0.0
      %307 = vmatpush.xpose.msra.mxu0 %v290
      %308 = vmatmul.f32.gmra.mxu0 %v287
      %v309 = vpop.f32.mrf.mxu0
      %v310 = vadd.f32 0.0, %v309
      %311 = vdwg.mxu0
      %v312 = vsel %vm245, %v310, -inf
      %313 = vmax.xlane.f32.xlu0 %v312
      %v314 = vpop.xlane.xlu0 %313
      %v315 = vsub.f32 %v310, %v314
      %v316 = vmul.f32 %v315, 1.442695
      %v317 = vpow.pop %v316
      %v318 = vsel %vm245, %v317, 0.0
      %319 = vadd.xlane.f32.xlu0 %v318
      %v320 = vpop.xlane.xlu0 %319
      %v321 = vrcp.pop %v320
      %v322 = vmul.f32 %v317, %v321
      %v324 = vsel %vm245, %v322, 0
      %326 = vmatpush.msra.mxu0 0.0
      %327 = vmatpush.msra.mxu0 0.0
      %328 = vmatpush.msra.mxu0 0.0
      %329 = vmatpush.msra.mxu0 0.0
      %330 = vmatpush.msra.mxu0 0.0
      %331 = vmatpush.msra.mxu0 0.0
      %332 = vmatpush.msra.mxu0 0.0
      %333 = vmatpush.msra.mxu0 0.0
      %334 = vmatpush.msra.mxu0 0.0
      %335 = vmatpush.msra.mxu0 0.0
      %336 = vmatpush.msra.mxu0 0.0
      %337 = vmatpush.msra.mxu0 0.0
      %338 = vmatpush.msra.mxu0 0.0
      %339 = vmatpush.msra.mxu0 0.0
      %340 = vmatpush.msra.mxu0 0.0
      %341 = vmatpush.msra.mxu0 %v285
      %342 = vmatmul.f32.gmra.mxu0 %v324
      %v343 = vpop.f32.mrf.mxu0
      %v344 = vadd.f32 0.0, %v343
      %345 = vdwg.mxu0
      %s346 = scalar_lea.vmem %s197, 16
      %v347 = vld [vmem:[%s346] sm:$0xff]
      %s348 = scalar_lea.vmem %s203, 16
      %v349 = vld [vmem:[%s348] sm:$0xff]
      %s350 = scalar_lea.vmem %s209, 16
      %v351 = vld [vmem:[%s350] sm:$0xff]
      %v353 = vsel %vm218, %v347, 0
      %v356 = vsel %vm218, %v349, 0
      %358 = vmatpush.xpose.msra.mxu0 0.0
      %359 = vmatpush.xpose.msra.mxu0 0.0
      %360 = vmatpush.xpose.msra.mxu0 0.0
      %361 = vmatpush.xpose.msra.mxu0 0.0
      %362 = vmatpush.xpose.msra.mxu0 0.0
      %363 = vmatpush.xpose.msra.mxu0 0.0
      %364 = vmatpush.xpose.msra.mxu0 0.0
      %365 = vmatpush.xpose.msra.mxu0 0.0
      %366 = vmatpush.xpose.msra.mxu0 0.0
      %367 = vmatpush.xpose.msra.mxu0 0.0
      %368 = vmatpush.xpose.msra.mxu0 0.0
      %369 = vmatpush.xpose.msra.mxu0 0.0
      %370 = vmatpush.xpose.msra.mxu0 0.0
      %371 = vmatpush.xpose.msra.mxu0 0.0
      %372 = vmatpush.xpose.msra.mxu0 0.0
      %373 = vmatpush.xpose.msra.mxu0 %v356
      %374 = vmatmul.f32.gmra.mxu0 %v353
      %v375 = vpop.f32.mrf.mxu0
      %v376 = vadd.f32 0.0, %v375
      %377 = vdwg.mxu0
      %v378 = vsel %vm245, %v376, -inf
      %379 = vmax.xlane.f32.xlu0 %v378
      %v380 = vpop.xlane.xlu0 %379
      %v381 = vsub.f32 %v376, %v380
      %v382 = vmul.f32 %v381, 1.442695
      %v383 = vpow.pop %v382
      %v384 = vsel %vm245, %v383, 0.0
      %385 = vadd.xlane.f32.xlu0 %v384
      %v386 = vpop.xlane.xlu0 %385
      %v387 = vrcp.pop %v386
      %v388 = vmul.f32 %v383, %v387
      %v390 = vsel %vm245, %v388, 0
      %392 = vmatpush.msra.mxu0 0.0
      %393 = vmatpush.msra.mxu0 0.0
      %394 = vmatpush.msra.mxu0 0.0
      %395 = vmatpush.msra.mxu0 0.0
      %396 = vmatpush.msra.mxu0 0.0
      %397 = vmatpush.msra.mxu0 0.0
      %398 = vmatpush.msra.mxu0 0.0
      %399 = vmatpush.msra.mxu0 0.0
      %400 = vmatpush.msra.mxu0 0.0
      %401 = vmatpush.msra.mxu0 0.0
      %402 = vmatpush.msra.mxu0 0.0
      %403 = vmatpush.msra.mxu0 0.0
      %404 = vmatpush.msra.mxu0 0.0
      %405 = vmatpush.msra.mxu0 0.0
      %406 = vmatpush.msra.mxu0 0.0
      %407 = vmatpush.msra.mxu0 %v351
      %408 = vmatmul.f32.gmra.mxu0 %v390
      %v409 = vpop.f32.mrf.mxu0
      %v410 = vadd.f32 0.0, %v409
      %411 = vdwg.mxu0
      %s412 = scalar_lea.vmem %s197, 24
      %v413 = vld [vmem:[%s412] sm:$0xff]
      %s414 = scalar_lea.vmem %s203, 24
      %v415 = vld [vmem:[%s414] sm:$0xff]
      %s416 = scalar_lea.vmem %s209, 24
      %v417 = vld [vmem:[%s416] sm:$0xff]
      %v419 = vsel %vm218, %v413, 0
      %v422 = vsel %vm218, %v415, 0
      %424 = vmatpush.xpose.msra.mxu0 0.0
      %425 = vmatpush.xpose.msra.mxu0 0.0
      %426 = vmatpush.xpose.msra.mxu0 0.0
      %427 = vmatpush.xpose.msra.mxu0 0.0
      %428 = vmatpush.xpose.msra.mxu0 0.0
      %429 = vmatpush.xpose.msra.mxu0 0.0
      %430 = vmatpush.xpose.msra.mxu0 0.0
      %431 = vmatpush.xpose.msra.mxu0 0.0
      %432 = vmatpush.xpose.msra.mxu0 0.0
      %433 = vmatpush.xpose.msra.mxu0 0.0
      %434 = vmatpush.xpose.msra.mxu0 0.0
      %435 = vmatpush.xpose.msra.mxu0 0.0
      %436 = vmatpush.xpose.msra.mxu0 0.0
      %437 = vmatpush.xpose.msra.mxu0 0.0
      %438 = vmatpush.xpose.msra.mxu0 0.0
      %439 = vmatpush.xpose.msra.mxu0 %v422
      %440 = vmatmul.f32.gmra.mxu0 %v419
      %v441 = vpop.f32.mrf.mxu0
      %v442 = vadd.f32 0.0, %v441
      %443 = vdwg.mxu0
      %v444 = vsel %vm245, %v442, -inf
      %445 = vmax.xlane.f32.xlu0 %v444
      %v446 = vpop.xlane.xlu0 %445
      %v447 = vsub.f32 %v442, %v446
      %v448 = vmul.f32 %v447, 1.442695
      %v449 = vpow.pop %v448
      %v450 = vsel %vm245, %v449, 0.0
      %451 = vadd.xlane.f32.xlu0 %v450
      %v452 = vpop.xlane.xlu0 %451
      %v453 = vrcp.pop %v452
      %v454 = vmul.f32 %v449, %v453
      %v456 = vsel %vm245, %v454, 0
      %458 = vmatpush.msra.mxu0 0.0
      %459 = vmatpush.msra.mxu0 0.0
      %460 = vmatpush.msra.mxu0 0.0
      %461 = vmatpush.msra.mxu0 0.0
      %462 = vmatpush.msra.mxu0 0.0
      %463 = vmatpush.msra.mxu0 0.0
      %464 = vmatpush.msra.mxu0 0.0
      %465 = vmatpush.msra.mxu0 0.0
      %466 = vmatpush.msra.mxu0 0.0
      %467 = vmatpush.msra.mxu0 0.0
      %468 = vmatpush.msra.mxu0 0.0
      %469 = vmatpush.msra.mxu0 0.0
      %470 = vmatpush.msra.mxu0 0.0
      %471 = vmatpush.msra.mxu0 0.0
      %472 = vmatpush.msra.mxu0 0.0
      %473 = vmatpush.msra.mxu0 %v417
      %474 = vmatmul.f32.gmra.mxu0 %v456
      %v475 = vpop.f32.mrf.mxu0
      %v476 = vadd.f32 0.0, %v475
      %477 = vdwg.mxu0
      %s478 = scalar_lea.vmem %s197, 32
      %v479 = vld [vmem:[%s478] sm:$0xff]
      %s480 = scalar_lea.vmem %s203, 32
      %v481 = vld [vmem:[%s480] sm:$0xff]
      %s482 = scalar_lea.vmem %s209, 32
      %v483 = vld [vmem:[%s482] sm:$0xff]
      %v485 = vsel %vm218, %v479, 0
      %v488 = vsel %vm218, %v481, 0
      %490 = vmatpush.xpose.msra.mxu0 0.0
      %491 = vmatpush.xpose.msra.mxu0 0.0
      %492 = vmatpush.xpose.msra.mxu0 0.0
      %493 = vmatpush.xpose.msra.mxu0 0.0
      %494 = vmatpush.xpose.msra.mxu0 0.0
      %495 = vmatpush.xpose.msra.mxu0 0.0
      %496 = vmatpush.xpose.msra.mxu0 0.0
      %497 = vmatpush.xpose.msra.mxu0 0.0
      %498 = vmatpush.xpose.msra.mxu0 0.0
      %499 = vmatpush.xpose.msra.mxu0 0.0
      %500 = vmatpush.xpose.msra.mxu0 0.0
      %501 = vmatpush.xpose.msra.mxu0 0.0
      %502 = vmatpush.xpose.msra.mxu0 0.0
      %503 = vmatpush.xpose.msra.mxu0 0.0
      %504 = vmatpush.xpose.msra.mxu0 0.0
      %505 = vmatpush.xpose.msra.mxu0 %v488
      %506 = vmatmul.f32.gmra.mxu0 %v485
      %v507 = vpop.f32.mrf.mxu0
      %v508 = vadd.f32 0.0, %v507
      %509 = vdwg.mxu0
      %v510 = vsel %vm245, %v508, -inf
      %511 = vmax.xlane.f32.xlu0 %v510
      %v512 = vpop.xlane.xlu0 %511
      %v513 = vsub.f32 %v508, %v512
      %v514 = vmul.f32 %v513, 1.442695
      %v515 = vpow.pop %v514
      %v516 = vsel %vm245, %v515, 0.0
      %517 = vadd.xlane.f32.xlu0 %v516
      %v518 = vpop.xlane.xlu0 %517
      %v519 = vrcp.pop %v518
      %v520 = vmul.f32 %v515, %v519
      %v522 = vsel %vm245, %v520, 0
      %524 = vmatpush.msra.mxu0 0.0
      %525 = vmatpush.msra.mxu0 0.0
      %526 = vmatpush.msra.mxu0 0.0
      %527 = vmatpush.msra.mxu0 0.0
      %528 = vmatpush.msra.mxu0 0.0
      %529 = vmatpush.msra.mxu0 0.0
      %530 = vmatpush.msra.mxu0 0.0
      %531 = vmatpush.msra.mxu0 0.0
      %532 = vmatpush.msra.mxu0 0.0
      %533 = vmatpush.msra.mxu0 0.0
      %534 = vmatpush.msra.mxu0 0.0
      %535 = vmatpush.msra.mxu0 0.0
      %536 = vmatpush.msra.mxu0 0.0
      %537 = vmatpush.msra.mxu0 0.0
      %538 = vmatpush.msra.mxu0 0.0
      %539 = vmatpush.msra.mxu0 %v483
      %540 = vmatmul.f32.gmra.mxu0 %v522
      %v541 = vpop.f32.mrf.mxu0
      %v542 = vadd.f32 0.0, %v541
      %543 = vdwg.mxu0
      %s544 = scalar_lea.vmem %s197, 40
      %v545 = vld [vmem:[%s544] sm:$0xff]
      %s546 = scalar_lea.vmem %s203, 40
      %v547 = vld [vmem:[%s546] sm:$0xff]
      %s548 = scalar_lea.vmem %s209, 40
      %v549 = vld [vmem:[%s548] sm:$0xff]
      %v551 = vsel %vm218, %v545, 0
      %v554 = vsel %vm218, %v547, 0
      %556 = vmatpush.xpose.msra.mxu0 0.0
      %557 = vmatpush.xpose.msra.mxu0 0.0
      %558 = vmatpush.xpose.msra.mxu0 0.0
      %559 = vmatpush.xpose.msra.mxu0 0.0
      %560 = vmatpush.xpose.msra.mxu0 0.0
      %561 = vmatpush.xpose.msra.mxu0 0.0
      %562 = vmatpush.xpose.msra.mxu0 0.0
      %563 = vmatpush.xpose.msra.mxu0 0.0
      %564 = vmatpush.xpose.msra.mxu0 0.0
      %565 = vmatpush.xpose.msra.mxu0 0.0
      %566 = vmatpush.xpose.msra.mxu0 0.0
      %567 = vmatpush.xpose.msra.mxu0 0.0
      %568 = vmatpush.xpose.msra.mxu0 0.0
      %569 = vmatpush.xpose.msra.mxu0 0.0
      %570 = vmatpush.xpose.msra.mxu0 0.0
      %571 = vmatpush.xpose.msra.mxu0 %v554
      %572 = vmatmul.f32.gmra.mxu0 %v551
      %v573 = vpop.f32.mrf.mxu0
      %v574 = vadd.f32 0.0, %v573
      %575 = vdwg.mxu0
      %v576 = vsel %vm245, %v574, -inf
      %577 = vmax.xlane.f32.xlu0 %v576
      %v578 = vpop.xlane.xlu0 %577
      %v579 = vsub.f32 %v574, %v578
      %v580 = vmul.f32 %v579, 1.442695
      %v581 = vpow.pop %v580
      %v582 = vsel %vm245, %v581, 0.0
      %583 = vadd.xlane.f32.xlu0 %v582
      %v584 = vpop.xlane.xlu0 %583
      %v585 = vrcp.pop %v584
      %v586 = vmul.f32 %v581, %v585
      %v588 = vsel %vm245, %v586, 0
      %590 = vmatpush.msra.mxu0 0.0
      %591 = vmatpush.msra.mxu0 0.0
      %592 = vmatpush.msra.mxu0 0.0
      %593 = vmatpush.msra.mxu0 0.0
      %594 = vmatpush.msra.mxu0 0.0
      %595 = vmatpush.msra.mxu0 0.0
      %596 = vmatpush.msra.mxu0 0.0
      %597 = vmatpush.msra.mxu0 0.0
      %598 = vmatpush.msra.mxu0 0.0
      %599 = vmatpush.msra.mxu0 0.0
      %600 = vmatpush.msra.mxu0 0.0
      %601 = vmatpush.msra.mxu0 0.0
      %602 = vmatpush.msra.mxu0 0.0
      %603 = vmatpush.msra.mxu0 0.0
      %604 = vmatpush.msra.mxu0 0.0
      %605 = vmatpush.msra.mxu0 %v549
      %606 = vmatmul.f32.gmra.mxu0 %v588
      %v607 = vpop.f32.mrf.mxu0
      %v608 = vadd.f32 0.0, %v607
      %609 = vdwg.mxu0
      %s610 = scalar_lea.vmem %s197, 48
      %v611 = vld [vmem:[%s610] sm:$0xff]
      %s612 = scalar_lea.vmem %s203, 48
      %v613 = vld [vmem:[%s612] sm:$0xff]
      %s614 = scalar_lea.vmem %s209, 48
      %v615 = vld [vmem:[%s614] sm:$0xff]
      %v617 = vsel %vm218, %v611, 0
      %v620 = vsel %vm218, %v613, 0
      %622 = vmatpush.xpose.msra.mxu0 0.0
      %623 = vmatpush.xpose.msra.mxu0 0.0
      %624 = vmatpush.xpose.msra.mxu0 0.0
      %625 = vmatpush.xpose.msra.mxu0 0.0
      %626 = vmatpush.xpose.msra.mxu0 0.0
      %627 = vmatpush.xpose.msra.mxu0 0.0
      %628 = vmatpush.xpose.msra.mxu0 0.0
      %629 = vmatpush.xpose.msra.mxu0 0.0
      %630 = vmatpush.xpose.msra.mxu0 0.0
      %631 = vmatpush.xpose.msra.mxu0 0.0
      %632 = vmatpush.xpose.msra.mxu0 0.0
      %633 = vmatpush.xpose.msra.mxu0 0.0
      %634 = vmatpush.xpose.msra.mxu0 0.0
      %635 = vmatpush.xpose.msra.mxu0 0.0
      %636 = vmatpush.xpose.msra.mxu0 0.0
      %637 = vmatpush.xpose.msra.mxu0 %v620
      %638 = vmatmul.f32.gmra.mxu0 %v617
      %v639 = vpop.f32.mrf.mxu0
      %v640 = vadd.f32 0.0, %v639
      %641 = vdwg.mxu0
      %v642 = vsel %vm245, %v640, -inf
      %643 = vmax.xlane.f32.xlu0 %v642
      %v644 = vpop.xlane.xlu0 %643
      %v645 = vsub.f32 %v640, %v644
      %v646 = vmul.f32 %v645, 1.442695
      %v647 = vpow.pop %v646
      %v648 = vsel %vm245, %v647, 0.0
      %649 = vadd.xlane.f32.xlu0 %v648
      %v650 = vpop.xlane.xlu0 %649
      %v651 = vrcp.pop %v650
      %v652 = vmul.f32 %v647, %v651
      %v654 = vsel %vm245, %v652, 0
      %656 = vmatpush.msra.mxu0 0.0
      %657 = vmatpush.msra.mxu0 0.0
      %658 = vmatpush.msra.mxu0 0.0
      %659 = vmatpush.msra.mxu0 0.0
      %660 = vmatpush.msra.mxu0 0.0
      %661 = vmatpush.msra.mxu0 0.0
      %662 = vmatpush.msra.mxu0 0.0
      %663 = vmatpush.msra.mxu0 0.0
      %664 = vmatpush.msra.mxu0 0.0
      %665 = vmatpush.msra.mxu0 0.0
      %666 = vmatpush.msra.mxu0 0.0
      %667 = vmatpush.msra.mxu0 0.0
      %668 = vmatpush.msra.mxu0 0.0
      %669 = vmatpush.msra.mxu0 0.0
      %670 = vmatpush.msra.mxu0 0.0
      %671 = vmatpush.msra.mxu0 %v615
      %672 = vmatmul.f32.gmra.mxu0 %v654
      %v673 = vpop.f32.mrf.mxu0
      %v674 = vadd.f32 0.0, %v673
      %675 = vdwg.mxu0
      %s676 = scalar_lea.vmem %s197, 56
      %v677 = vld [vmem:[%s676] sm:$0xff]
      %s678 = scalar_lea.vmem %s203, 56
      %v679 = vld [vmem:[%s678] sm:$0xff]
      %s680 = scalar_lea.vmem %s209, 56
      %v681 = vld [vmem:[%s680] sm:$0xff]
      %v683 = vsel %vm218, %v677, 0
      %v686 = vsel %vm218, %v679, 0
      %688 = vmatpush.xpose.msra.mxu0 0.0
      %689 = vmatpush.xpose.msra.mxu0 0.0
      %690 = vmatpush.xpose.msra.mxu0 0.0
      %691 = vmatpush.xpose.msra.mxu0 0.0
      %692 = vmatpush.xpose.msra.mxu0 0.0
      %693 = vmatpush.xpose.msra.mxu0 0.0
      %694 = vmatpush.xpose.msra.mxu0 0.0
      %695 = vmatpush.xpose.msra.mxu0 0.0
      %696 = vmatpush.xpose.msra.mxu0 0.0
      %697 = vmatpush.xpose.msra.mxu0 0.0
      %698 = vmatpush.xpose.msra.mxu0 0.0
      %699 = vmatpush.xpose.msra.mxu0 0.0
      %700 = vmatpush.xpose.msra.mxu0 0.0
      %701 = vmatpush.xpose.msra.mxu0 0.0
      %702 = vmatpush.xpose.msra.mxu0 0.0
      %703 = vmatpush.xpose.msra.mxu0 %v686
      %704 = vmatmul.f32.gmra.mxu0 %v683
      %v705 = vpop.f32.mrf.mxu0
      %v706 = vadd.f32 0.0, %v705
      %707 = vdwg.mxu0
      %v708 = vsel %vm245, %v706, -inf
      %709 = vmax.xlane.f32.xlu0 %v708
      %v710 = vpop.xlane.xlu0 %709
      %v711 = vsub.f32 %v706, %v710
      %v712 = vmul.f32 %v711, 1.442695
      %v713 = vpow.pop %v712
      %v714 = vsel %vm245, %v713, 0.0
      %715 = vadd.xlane.f32.xlu0 %v714
      %v716 = vpop.xlane.xlu0 %715
      %v717 = vrcp.pop %v716
      %v718 = vmul.f32 %v713, %v717
      %v720 = vsel %vm245, %v718, 0
      %722 = vmatpush.msra.mxu0 0.0
      %723 = vmatpush.msra.mxu0 0.0
      %724 = vmatpush.msra.mxu0 0.0
      %725 = vmatpush.msra.mxu0 0.0
      %726 = vmatpush.msra.mxu0 0.0
      %727 = vmatpush.msra.mxu0 0.0
      %728 = vmatpush.msra.mxu0 0.0
      %729 = vmatpush.msra.mxu0 0.0
      %730 = vmatpush.msra.mxu0 0.0
      %731 = vmatpush.msra.mxu0 0.0
      %732 = vmatpush.msra.mxu0 0.0
      %733 = vmatpush.msra.mxu0 0.0
      %734 = vmatpush.msra.mxu0 0.0
      %735 = vmatpush.msra.mxu0 0.0
      %736 = vmatpush.msra.mxu0 0.0
      %737 = vmatpush.msra.mxu0 %v681
      %738 = vmatmul.f32.gmra.mxu0 %v720
      %v739 = vpop.f32.mrf.mxu0
      %v740 = vadd.f32 0.0, %v739
      %741 = vdwg.mxu0
      %743 = vrot.lane.b32.xlu0 %v344, 4
      %v744 = vpop.permute.xlu0 %743
      %747 = vrot.lane.b32.xlu0 %v410, 8
      %v748 = vpop.permute.xlu0 %747
      %751 = vrot.lane.b32.xlu0 %v476, 12
      %v752 = vpop.permute.xlu0 %751
      %755 = vrot.lane.b32.xlu0 %v542, 16
      %v756 = vpop.permute.xlu0 %755
      %759 = vrot.lane.b32.xlu0 %v608, 20
      %v760 = vpop.permute.xlu0 %759
      %763 = vrot.lane.b32.xlu0 %v674, 24
      %v764 = vpop.permute.xlu0 %763
      %767 = vrot.lane.b32.xlu0 %v740, 28
      %v768 = vpop.permute.xlu0 %767
      %v770 = vsel %vm218, %v278, %v744
      %v771 = vsel %vm245, %v770, %v748
      %vm772 = vcmask 97280
      %v773 = vsel %vm772, %v771, %v752
      %vm774 = vcmask 130048
      %v775 = vsel %vm774, %v773, %v756
      %vm776 = vcmask 162816
      %v777 = vsel %vm776, %v775, %v760
      %vm778 = vcmask 195584
      %v779 = vsel %vm778, %v777, %v764
      %vm780 = vcmask 228352
      %v781 = vsel %vm780, %v779, %v768
      %vm782 = vcmask 261120
      %783 = vst.msk [vmem:[%s214] sm:$0xff] %vm782, %v781
      %p784 = scmp.lt.s32.totalorder %s14, 1
      %s785 = scalar_select %p784, %s14, 1
      %s786 = smul.addr %s785, 8
      %s787 = scalar_lea.vmem %s3, %s786
      // Predicated region
      $region33: #{fuser_forward.6} parent=31 // pred_check
        %p788 = pneg %p110
      $region34: #{fuser_forward.6} parent=31 // pred_check_branch
        %790 = sbr.rel (%p788) target = $region36
      $region35: #{fuser_forward.6} parent=31 // pred_region
        _
      $region36: #{fuser_forward.6} parent=31 // pred_fallthru
        _
    $region32: #{fuser_forward.6} parent=5 // pred_fallthru
      _
    %p791 = scmp.le.s32.totalorder 2, %s9
    // Predicated region
    $region37: #{fuser_forward.6} parent=5 // pred_check
      %p792 = pneg %p791
    $region38: #{fuser_forward.6} parent=5 // pred_check_branch
      %794 = sbr.rel (%p792) target = $region40
    $region39: #{fuser_forward.6} parent=5 // pred_region
      %s795 = ssub.s32 %s9, 2
      // Predicated region
      $region41: #{fuser_forward.6} parent=39 // pred_check
        %p796 = pneg %p116
      $region42: #{fuser_forward.6} parent=39 // pred_check_branch
        %798 = sbr.rel (%p796) target = $region44
      $region43: #{fuser_forward.6} parent=39 // pred_region
        %p799 = scmp.lt.s32.totalorder %s15, 1
        %s800 = scalar_select %p799, %s15, 1
        %s801 = smul.addr %s800, 8
        %s802 = scalar_lea.vmem %s3, %s801
      $region44: #{fuser_forward.6} parent=39 // pred_fallthru
        _
    $region40: #{fuser_forward.6} parent=5 // pred_fallthru
      _
  $region6: #{fuser_forward.6} parent=0 // loop_footer
    %s13 = sadd.s32 1, %s9
  $region7: #{fuser_forward.6} parent=0 // loop_footer_branch
    %8 = sbr.rel target = $region3
  $region8: #{fuser_forward.6} parent=0 // loop_exit
    _

</llo_original>
